<compile_context>
chip_gen: v7x
topology: tpu7x:2x2x1
jax: 0.10.0
libtpu: 0.0.40
codegen_flags: <defaults>
</compile_context>

<pallas_src>
import functools

import jax
import jax.numpy as jnp
from jax.experimental import pallas as pl
from jax.experimental.pallas import tpu as pltpu


def _fast_sigmoid(z):
    # sigmoid(z) == 0.5 * tanh(0.5 * z) + 0.5 ; single EUP tanh pass.
    return 0.5 * jnp.tanh(0.5 * z) + 0.5


# ----------------------------------------------------------------------------
# Fused kernel: all LSTM layers + logistic head in one invocation (no grid).
# ----------------------------------------------------------------------------
def _fused_lstm_kernel(num_layers, hidden, seq_len, batch, x_ref, *refs):
    """Fused stacked-LSTM + logistic head.

    x_ref : (T*B, I)  time-major, pre-flattened input (row t*B+b = step t, seq b)

    refs layout (inputs then outputs):
      refs[3l + 0] : (I_l, 4H)   transposed weight_ih of layer l
      refs[3l + 1] : (H, 4H)     transposed weight_hh of layer l
      refs[3l + 2] : (1, 4H)     b_ih + b_hh of layer l
      refs[3L + 0] : (H, 2)      transposed logistic weight
      refs[3L + 1] : (1, 2)      logistic bias
      refs[3L + 2] : (B, 2)      probs output
      refs[3L + 3] : (L, B, 2H)  packed [h_n | c_n] output
    """
    L, H, T, B = num_layers, hidden, seq_len, batch
    w_log_ref = refs[3 * L]
    b_log_ref = refs[3 * L + 1]
    probs_ref = refs[3 * L + 2]
    hc_ref = refs[3 * L + 3]

    # ---- layer 0: ONE batched input-side projection for the whole sequence --
    w_ih0 = refs[0][...]                                   # (I, 4H)
    bias0 = jnp.broadcast_to(refs[2][...], (T * B, 4 * H))  # hoisted broadcast
    gx_all = (
        jnp.dot(x_ref[...], w_ih0, preferred_element_type=jnp.float32) + bias0
    )                                                      # (T*B, 4H)

    h = None
    layer_out = None                                       # list of T (B,H) values
    for l in range(L):
        w_hh = refs[3 * l + 1][...]                        # (H, 4H)

        if l == 0:
            # Contiguous per-step row slices of the batched projection.
            gx = [gx_all[t * B:(t + 1) * B, :] for t in range(T)]
        else:
            # Keep per-step projections so step t only depends on the previous
            # layer's step t (preserves the cross-layer wavefront).
            w_ih = refs[3 * l][...]                        # (H, 4H)
            bias = jnp.broadcast_to(refs[3 * l + 2][...], (B, 4 * H))
            gx = [
                jnp.dot(layer_out[t], w_ih, preferred_element_type=jnp.float32)
                + bias
                for t in range(T)
            ]

        h = jnp.zeros((B, H), jnp.float32)
        c = jnp.zeros((B, H), jnp.float32)
        outs = []
        for t in range(T):                                 # fully unrolled (T static)
            # One matmul per step on the sequential dependence chain.
            gates = gx[t] + jnp.dot(h, w_hh, preferred_element_type=jnp.float32)
            sig = _fast_sigmoid(gates)                     # one (B,4H) EUP tanh pass
            tnh = jnp.tanh(gates)                          # one (B,4H) EUP tanh pass
            # PyTorch gate order [i, f, g, o].
            i_g = sig[:, 0 * H:1 * H]
            f_g = sig[:, 1 * H:2 * H]
            g_g = tnh[:, 2 * H:3 * H]
            o_g = sig[:, 3 * H:4 * H]
            c = f_g * c + i_g * g_g
            h = o_g * jnp.tanh(c)
            outs.append(h)

        # Packed [h | c] final state for this layer → one write per layer.
        hc_ref[l] = jnp.concatenate([h, c], axis=-1)
        layer_out = outs                                   # feed next layer (VMEM only)

    # Logistic head fused into the same kernel: sigmoid(h_n[-1] @ W^T + b).
    logits = (
        jnp.dot(h, w_log_ref[...], preferred_element_type=jnp.float32)
        + b_log_ref[...]
    )
    probs_ref[...] = _fast_sigmoid(logits)


# ----------------------------------------------------------------------------
# Full module forward: ONE pallas_call for everything.
# ----------------------------------------------------------------------------
@jax.jit
def simple_forward(x_btI, params):
    """x_btI: (B, T, 10), batch_first like the PyTorch module."""
    B, T, I = x_btI.shape
    lstm_params = params["lstm"]
    L = len(lstm_params)
    H = lstm_params[0][1].shape[0]

    flat_weights = []
    for (w_ih_t, w_hh_t, bias) in lstm_params:
        flat_weights += [w_ih_t, w_hh_t, bias]

    # Time-major, pre-flattened input feeds layer-0's single batched matmul.
    x_flat = jnp.transpose(x_btI, (1, 0, 2)).reshape(T * B, I)

    n_inputs = 1 + 3 * L + 2
    vmem_spec = pl.BlockSpec(memory_space=pltpu.MemorySpace.VMEM)

    kernel = functools.partial(_fused_lstm_kernel, L, H, T, B)
    probs, hc = pl.pallas_call(
        kernel,
        out_shape=(
            jax.ShapeDtypeStruct((B, 2), jnp.float32),
            jax.ShapeDtypeStruct((L, B, 2 * H), jnp.float32),
        ),
        in_specs=[vmem_spec] * n_inputs,
        out_specs=(vmem_spec, vmem_spec),
    )(x_flat, *flat_weights, params["log_w_t"], params["log_b"])

    h_n = hc[:, :, :H]
    c_n = hc[:, :, H:]
    return probs, (h_n, c_n)


# ----------------------------------------------------------------------------
# Pure-JAX reference (for correctness checking only)
# ----------------------------------------------------------------------------
def _reference_forward(x_btI, params):
    x = jnp.transpose(x_btI, (1, 0, 2))
    h_fin, c_fin = [], []
    layer_in = x
    for (w_ih_t, w_hh_t, bias) in params["lstm"]:
        H = w_hh_t.shape[0]
        B = x.shape[1]

        def step(carry, x_t):
            h, c = carry
            g = x_t @ w_ih_t + h @ w_hh_t + bias[0]
            i = jax.nn.sigmoid(g[:, 0 * H:1 * H])
            f = jax.nn.sigmoid(g[:, 1 * H:2 * H])
            gg = jnp.tanh(g[:, 2 * H:3 * H])
            o = jax.nn.sigmoid(g[:, 3 * H:4 * H])
            c = f * c + i * gg
            h = o * jnp.tanh(c)
            return (h, c), h

        (hT, cT), y = jax.lax.scan(
            step, (jnp.zeros((B, H)), jnp.zeros((B, H))), layer_in
        )
        h_fin.append(hT)
        c_fin.append(cT)
        layer_in = y
    h_n = jnp.stack(h_fin, 0)
    c_n = jnp.stack(c_fin, 0)
    probs = jax.nn.sigmoid(h_n[-1] @ params["log_w_t"] + params["log_b"][0])
    return probs, (h_n, c_n)


# ----------------------------------------------------------------------------
# Deterministic parameter init (mimics PyTorch uniform(-1/sqrt(H), 1/sqrt(H)))
# ----------------------------------------------------------------------------
def init_params(key, input_size, hidden_size, layers):
    bound = 1.0 / jnp.sqrt(jnp.float32(hidden_size))
    lstm_params = []
    for l in range(layers):
        in_l = input_size if l == 0 else hidden_size
        key, k1, k2, k3, k4 = jax.random.split(key, 5)
        w_ih = jax.random.uniform(k1, (4 * hidden_size, in_l), jnp.float32, -bound, bound)
        w_hh = jax.random.uniform(k2, (4 * hidden_size, hidden_size), jnp.float32, -bound, bound)
        b_ih = jax.random.uniform(k3, (4 * hidden_size,), jnp.float32, -bound, bound)
        b_hh = jax.random.uniform(k4, (4 * hidden_size,), jnp.float32, -bound, bound)
        lstm_params.append((w_ih.T, w_hh.T, (b_ih + b_hh)[None, :]))
    key, k5, k6 = jax.random.split(key, 3)
    log_w = jax.random.uniform(k5, (2, hidden_size), jnp.float32, -bound, bound)
    log_b = jax.random.uniform(k6, (2,), jnp.float32, -bound, bound)
    return {"lstm": lstm_params, "log_w_t": log_w.T, "log_b": log_b[None, :]}


if __name__ == "__main__":
    INPUT_SIZE = 10   # fixed by nn.LSTM(10, ...)
    HIDDEN = 32
    LAYERS = 2
    BATCH = 2
    SEQ = 8

    key = jax.random.PRNGKey(0)
    key, kx = jax.random.split(key)
    x = jax.random.normal(kx, (BATCH, SEQ, INPUT_SIZE), dtype=jnp.float32)

    params = init_params(key, INPUT_SIZE, HIDDEN, LAYERS)

    probs, (h_n, c_n) = simple_forward(x, params)
    jax.block_until_ready((probs, h_n, c_n))

    # correctness check against pure-JAX reference
    r_probs, (r_h, r_c) = _reference_forward(x, params)
    assert probs.shape == (BATCH, 2)
    assert h_n.shape == (LAYERS, BATCH, HIDDEN)
    assert c_n.shape == (LAYERS, BATCH, HIDDEN)
    assert jnp.allclose(probs, r_probs, atol=1e-4), "probs mismatch"
    assert jnp.allclose(h_n, r_h, atol=1e-4), "h_n mismatch"
    assert jnp.allclose(c_n, r_c, atol=1e-4), "c_n mismatch"

    print("KERNEL_OK")
</pallas_src>

<mosaic_0001>
module attributes {stable_mosaic.version = 11 : i64} {
  func.func @_fused_lstm_kernel(%arg0: memref<16x10xf32, #tpu.memory_space<vmem>>, %arg1: memref<10x128xf32, #tpu.memory_space<vmem>>, %arg2: memref<32x128xf32, #tpu.memory_space<vmem>>, %arg3: memref<1x128xf32, #tpu.memory_space<vmem>>, %arg4: memref<32x128xf32, #tpu.memory_space<vmem>>, %arg5: memref<32x128xf32, #tpu.memory_space<vmem>>, %arg6: memref<1x128xf32, #tpu.memory_space<vmem>>, %arg7: memref<32x2xf32, #tpu.memory_space<vmem>>, %arg8: memref<1x2xf32, #tpu.memory_space<vmem>>, %arg9: memref<2x2xf32, #tpu.memory_space<vmem>>, %arg10: memref<2x2x64xf32, #tpu.memory_space<vmem>>) attributes {dimension_semantics = [], scalar_prefetch = 0 : i64, scratch_operands = 0 : i64, tpu.core_type = #tpu.core_type<tc>} {
    %c0 = arith.constant 0 : index
    %c0_0 = arith.constant 0 : index
    %0 = vector.load %arg1[%c0, %c0_0] : memref<10x128xf32, #tpu.memory_space<vmem>>, vector<10x128xf32>
    %c0_1 = arith.constant 0 : index
    %c0_2 = arith.constant 0 : index
    %1 = vector.load %arg3[%c0_1, %c0_2] : memref<1x128xf32, #tpu.memory_space<vmem>>, vector<1x128xf32>
    %2 = vector.shape_cast %1 : vector<1x128xf32> to vector<1x128xf32>
    %3 = vector.broadcast %2 : vector<1x128xf32> to vector<16x128xf32>
    %c0_3 = arith.constant 0 : index
    %c0_4 = arith.constant 0 : index
    %4 = vector.load %arg0[%c0_3, %c0_4] : memref<16x10xf32, #tpu.memory_space<vmem>>, vector<16x10xf32>
    %cst = arith.constant dense<0.000000e+00> : vector<16x128xf32>
    %5 = tpu.matmul %4, %0, %cst {dimension_numbers = #tpu.dot_dimension_numbers<[1], [0], [0], [1], [0, 0, 1, 1], [], []>} : vector<16x10xf32>, vector<10x128xf32>, vector<16x128xf32> -> vector<16x128xf32>
    %6 = arith.addf %5, %3 : vector<16x128xf32>
    %c0_5 = arith.constant 0 : index
    %c0_6 = arith.constant 0 : index
    %7 = vector.load %arg2[%c0_5, %c0_6] : memref<32x128xf32, #tpu.memory_space<vmem>>, vector<32x128xf32>
    %8 = vector.extract_strided_slice %6 {offsets = [0, 0], sizes = [2, 128], strides = [1, 1]} : vector<16x128xf32> to vector<2x128xf32>
    %9 = vector.extract_strided_slice %6 {offsets = [2, 0], sizes = [2, 128], strides = [1, 1]} : vector<16x128xf32> to vector<2x128xf32>
    %10 = vector.extract_strided_slice %6 {offsets = [4, 0], sizes = [2, 128], strides = [1, 1]} : vector<16x128xf32> to vector<2x128xf32>
    %11 = vector.extract_strided_slice %6 {offsets = [6, 0], sizes = [2, 128], strides = [1, 1]} : vector<16x128xf32> to vector<2x128xf32>
    %12 = vector.extract_strided_slice %6 {offsets = [8, 0], sizes = [2, 128], strides = [1, 1]} : vector<16x128xf32> to vector<2x128xf32>
    %13 = vector.extract_strided_slice %6 {offsets = [10, 0], sizes = [2, 128], strides = [1, 1]} : vector<16x128xf32> to vector<2x128xf32>
    %14 = vector.extract_strided_slice %6 {offsets = [12, 0], sizes = [2, 128], strides = [1, 1]} : vector<16x128xf32> to vector<2x128xf32>
    %15 = vector.extract_strided_slice %6 {offsets = [14, 0], sizes = [2, 128], strides = [1, 1]} : vector<16x128xf32> to vector<2x128xf32>
    %cst_7 = arith.constant 0.000000e+00 : f32
    %16 = vector.broadcast %cst_7 : f32 to vector<2x32xf32>
    %cst_8 = arith.constant 0.000000e+00 : f32
    %17 = vector.broadcast %cst_8 : f32 to vector<2x32xf32>
    %cst_9 = arith.constant dense<0.000000e+00> : vector<2x128xf32>
    %18 = tpu.matmul %16, %7, %cst_9 {dimension_numbers = #tpu.dot_dimension_numbers<[1], [0], [0], [1], [0, 0, 1, 1], [], []>} : vector<2x32xf32>, vector<32x128xf32>, vector<2x128xf32> -> vector<2x128xf32>
    %19 = arith.addf %8, %18 : vector<2x128xf32>
    %cst_10 = arith.constant 5.000000e-01 : f32
    %20 = vector.broadcast %cst_10 : f32 to vector<2x128xf32>
    %21 = arith.mulf %20, %19 : vector<2x128xf32>
    %22 = math.tanh %21 : vector<2x128xf32>
    %cst_11 = arith.constant 5.000000e-01 : f32
    %23 = vector.broadcast %cst_11 : f32 to vector<2x128xf32>
    %24 = arith.mulf %23, %22 : vector<2x128xf32>
    %cst_12 = arith.constant 5.000000e-01 : f32
    %25 = vector.broadcast %cst_12 : f32 to vector<2x128xf32>
    %26 = arith.addf %24, %25 : vector<2x128xf32>
    %27 = math.tanh %19 : vector<2x128xf32>
    %28 = vector.extract_strided_slice %26 {offsets = [0, 0], sizes = [2, 32], strides = [1, 1]} : vector<2x128xf32> to vector<2x32xf32>
    %29 = vector.extract_strided_slice %26 {offsets = [0, 32], sizes = [2, 32], strides = [1, 1]} : vector<2x128xf32> to vector<2x32xf32>
    %30 = vector.extract_strided_slice %27 {offsets = [0, 64], sizes = [2, 32], strides = [1, 1]} : vector<2x128xf32> to vector<2x32xf32>
    %31 = vector.extract_strided_slice %26 {offsets = [0, 96], sizes = [2, 32], strides = [1, 1]} : vector<2x128xf32> to vector<2x32xf32>
    %32 = arith.mulf %29, %17 : vector<2x32xf32>
    %33 = arith.mulf %28, %30 : vector<2x32xf32>
    %34 = arith.addf %32, %33 : vector<2x32xf32>
    %35 = math.tanh %34 : vector<2x32xf32>
    %36 = arith.mulf %31, %35 : vector<2x32xf32>
    %cst_13 = arith.constant dense<0.000000e+00> : vector<2x128xf32>
    %37 = tpu.matmul %36, %7, %cst_13 {dimension_numbers = #tpu.dot_dimension_numbers<[1], [0], [0], [1], [0, 0, 1, 1], [], []>} : vector<2x32xf32>, vector<32x128xf32>, vector<2x128xf32> -> vector<2x128xf32>
    %38 = arith.addf %9, %37 : vector<2x128xf32>
    %cst_14 = arith.constant 5.000000e-01 : f32
    %39 = vector.broadcast %cst_14 : f32 to vector<2x128xf32>
    %40 = arith.mulf %39, %38 : vector<2x128xf32>
    %41 = math.tanh %40 : vector<2x128xf32>
    %cst_15 = arith.constant 5.000000e-01 : f32
    %42 = vector.broadcast %cst_15 : f32 to vector<2x128xf32>
    %43 = arith.mulf %42, %41 : vector<2x128xf32>
    %cst_16 = arith.constant 5.000000e-01 : f32
    %44 = vector.broadcast %cst_16 : f32 to vector<2x128xf32>
    %45 = arith.addf %43, %44 : vector<2x128xf32>
    %46 = math.tanh %38 : vector<2x128xf32>
    %47 = vector.extract_strided_slice %45 {offsets = [0, 0], sizes = [2, 32], strides = [1, 1]} : vector<2x128xf32> to vector<2x32xf32>
    %48 = vector.extract_strided_slice %45 {offsets = [0, 32], sizes = [2, 32], strides = [1, 1]} : vector<2x128xf32> to vector<2x32xf32>
    %49 = vector.extract_strided_slice %46 {offsets = [0, 64], sizes = [2, 32], strides = [1, 1]} : vector<2x128xf32> to vector<2x32xf32>
    %50 = vector.extract_strided_slice %45 {offsets = [0, 96], sizes = [2, 32], strides = [1, 1]} : vector<2x128xf32> to vector<2x32xf32>
    %51 = arith.mulf %48, %34 : vector<2x32xf32>
    %52 = arith.mulf %47, %49 : vector<2x32xf32>
    %53 = arith.addf %51, %52 : vector<2x32xf32>
    %54 = math.tanh %53 : vector<2x32xf32>
    %55 = arith.mulf %50, %54 : vector<2x32xf32>
    %cst_17 = arith.constant dense<0.000000e+00> : vector<2x128xf32>
    %56 = tpu.matmul %55, %7, %cst_17 {dimension_numbers = #tpu.dot_dimension_numbers<[1], [0], [0], [1], [0, 0, 1, 1], [], []>} : vector<2x32xf32>, vector<32x128xf32>, vector<2x128xf32> -> vector<2x128xf32>
    %57 = arith.addf %10, %56 : vector<2x128xf32>
    %cst_18 = arith.constant 5.000000e-01 : f32
    %58 = vector.broadcast %cst_18 : f32 to vector<2x128xf32>
    %59 = arith.mulf %58, %57 : vector<2x128xf32>
    %60 = math.tanh %59 : vector<2x128xf32>
    %cst_19 = arith.constant 5.000000e-01 : f32
    %61 = vector.broadcast %cst_19 : f32 to vector<2x128xf32>
    %62 = arith.mulf %61, %60 : vector<2x128xf32>
    %cst_20 = arith.constant 5.000000e-01 : f32
    %63 = vector.broadcast %cst_20 : f32 to vector<2x128xf32>
    %64 = arith.addf %62, %63 : vector<2x128xf32>
    %65 = math.tanh %57 : vector<2x128xf32>
    %66 = vector.extract_strided_slice %64 {offsets = [0, 0], sizes = [2, 32], strides = [1, 1]} : vector<2x128xf32> to vector<2x32xf32>
    %67 = vector.extract_strided_slice %64 {offsets = [0, 32], sizes = [2, 32], strides = [1, 1]} : vector<2x128xf32> to vector<2x32xf32>
    %68 = vector.extract_strided_slice %65 {offsets = [0, 64], sizes = [2, 32], strides = [1, 1]} : vector<2x128xf32> to vector<2x32xf32>
    %69 = vector.extract_strided_slice %64 {offsets = [0, 96], sizes = [2, 32], strides = [1, 1]} : vector<2x128xf32> to vector<2x32xf32>
    %70 = arith.mulf %67, %53 : vector<2x32xf32>
    %71 = arith.mulf %66, %68 : vector<2x32xf32>
    %72 = arith.addf %70, %71 : vector<2x32xf32>
    %73 = math.tanh %72 : vector<2x32xf32>
    %74 = arith.mulf %69, %73 : vector<2x32xf32>
    %cst_21 = arith.constant dense<0.000000e+00> : vector<2x128xf32>
    %75 = tpu.matmul %74, %7, %cst_21 {dimension_numbers = #tpu.dot_dimension_numbers<[1], [0], [0], [1], [0, 0, 1, 1], [], []>} : vector<2x32xf32>, vector<32x128xf32>, vector<2x128xf32> -> vector<2x128xf32>
    %76 = arith.addf %11, %75 : vector<2x128xf32>
    %cst_22 = arith.constant 5.000000e-01 : f32
    %77 = vector.broadcast %cst_22 : f32 to vector<2x128xf32>
    %78 = arith.mulf %77, %76 : vector<2x128xf32>
    %79 = math.tanh %78 : vector<2x128xf32>
    %cst_23 = arith.constant 5.000000e-01 : f32
    %80 = vector.broadcast %cst_23 : f32 to vector<2x128xf32>
    %81 = arith.mulf %80, %79 : vector<2x128xf32>
    %cst_24 = arith.constant 5.000000e-01 : f32
    %82 = vector.broadcast %cst_24 : f32 to vector<2x128xf32>
    %83 = arith.addf %81, %82 : vector<2x128xf32>
    %84 = math.tanh %76 : vector<2x128xf32>
    %85 = vector.extract_strided_slice %83 {offsets = [0, 0], sizes = [2, 32], strides = [1, 1]} : vector<2x128xf32> to vector<2x32xf32>
    %86 = vector.extract_strided_slice %83 {offsets = [0, 32], sizes = [2, 32], strides = [1, 1]} : vector<2x128xf32> to vector<2x32xf32>
    %87 = vector.extract_strided_slice %84 {offsets = [0, 64], sizes = [2, 32], strides = [1, 1]} : vector<2x128xf32> to vector<2x32xf32>
    %88 = vector.extract_strided_slice %83 {offsets = [0, 96], sizes = [2, 32], strides = [1, 1]} : vector<2x128xf32> to vector<2x32xf32>
    %89 = arith.mulf %86, %72 : vector<2x32xf32>
    %90 = arith.mulf %85, %87 : vector<2x32xf32>
    %91 = arith.addf %89, %90 : vector<2x32xf32>
    %92 = math.tanh %91 : vector<2x32xf32>
    %93 = arith.mulf %88, %92 : vector<2x32xf32>
    %cst_25 = arith.constant dense<0.000000e+00> : vector<2x128xf32>
    %94 = tpu.matmul %93, %7, %cst_25 {dimension_numbers = #tpu.dot_dimension_numbers<[1], [0], [0], [1], [0, 0, 1, 1], [], []>} : vector<2x32xf32>, vector<32x128xf32>, vector<2x128xf32> -> vector<2x128xf32>
    %95 = arith.addf %12, %94 : vector<2x128xf32>
    %cst_26 = arith.constant 5.000000e-01 : f32
    %96 = vector.broadcast %cst_26 : f32 to vector<2x128xf32>
    %97 = arith.mulf %96, %95 : vector<2x128xf32>
    %98 = math.tanh %97 : vector<2x128xf32>
    %cst_27 = arith.constant 5.000000e-01 : f32
    %99 = vector.broadcast %cst_27 : f32 to vector<2x128xf32>
    %100 = arith.mulf %99, %98 : vector<2x128xf32>
    %cst_28 = arith.constant 5.000000e-01 : f32
    %101 = vector.broadcast %cst_28 : f32 to vector<2x128xf32>
    %102 = arith.addf %100, %101 : vector<2x128xf32>
    %103 = math.tanh %95 : vector<2x128xf32>
    %104 = vector.extract_strided_slice %102 {offsets = [0, 0], sizes = [2, 32], strides = [1, 1]} : vector<2x128xf32> to vector<2x32xf32>
    %105 = vector.extract_strided_slice %102 {offsets = [0, 32], sizes = [2, 32], strides = [1, 1]} : vector<2x128xf32> to vector<2x32xf32>
    %106 = vector.extract_strided_slice %103 {offsets = [0, 64], sizes = [2, 32], strides = [1, 1]} : vector<2x128xf32> to vector<2x32xf32>
    %107 = vector.extract_strided_slice %102 {offsets = [0, 96], sizes = [2, 32], strides = [1, 1]} : vector<2x128xf32> to vector<2x32xf32>
    %108 = arith.mulf %105, %91 : vector<2x32xf32>
    %109 = arith.mulf %104, %106 : vector<2x32xf32>
    %110 = arith.addf %108, %109 : vector<2x32xf32>
    %111 = math.tanh %110 : vector<2x32xf32>
    %112 = arith.mulf %107, %111 : vector<2x32xf32>
    %cst_29 = arith.constant dense<0.000000e+00> : vector<2x128xf32>
    %113 = tpu.matmul %112, %7, %cst_29 {dimension_numbers = #tpu.dot_dimension_numbers<[1], [0], [0], [1], [0, 0, 1, 1], [], []>} : vector<2x32xf32>, vector<32x128xf32>, vector<2x128xf32> -> vector<2x128xf32>
    %114 = arith.addf %13, %113 : vector<2x128xf32>
    %cst_30 = arith.constant 5.000000e-01 : f32
    %115 = vector.broadcast %cst_30 : f32 to vector<2x128xf32>
    %116 = arith.mulf %115, %114 : vector<2x128xf32>
    %117 = math.tanh %116 : vector<2x128xf32>
    %cst_31 = arith.constant 5.000000e-01 : f32
    %118 = vector.broadcast %cst_31 : f32 to vector<2x128xf32>
    %119 = arith.mulf %118, %117 : vector<2x128xf32>
    %cst_32 = arith.constant 5.000000e-01 : f32
    %120 = vector.broadcast %cst_32 : f32 to vector<2x128xf32>
    %121 = arith.addf %119, %120 : vector<2x128xf32>
    %122 = math.tanh %114 : vector<2x128xf32>
    %123 = vector.extract_strided_slice %121 {offsets = [0, 0], sizes = [2, 32], strides = [1, 1]} : vector<2x128xf32> to vector<2x32xf32>
    %124 = vector.extract_strided_slice %121 {offsets = [0, 32], sizes = [2, 32], strides = [1, 1]} : vector<2x128xf32> to vector<2x32xf32>
    %125 = vector.extract_strided_slice %122 {offsets = [0, 64], sizes = [2, 32], strides = [1, 1]} : vector<2x128xf32> to vector<2x32xf32>
    %126 = vector.extract_strided_slice %121 {offsets = [0, 96], sizes = [2, 32], strides = [1, 1]} : vector<2x128xf32> to vector<2x32xf32>
    %127 = arith.mulf %124, %110 : vector<2x32xf32>
    %128 = arith.mulf %123, %125 : vector<2x32xf32>
    %129 = arith.addf %127, %128 : vector<2x32xf32>
    %130 = math.tanh %129 : vector<2x32xf32>
    %131 = arith.mulf %126, %130 : vector<2x32xf32>
    %cst_33 = arith.constant dense<0.000000e+00> : vector<2x128xf32>
    %132 = tpu.matmul %131, %7, %cst_33 {dimension_numbers = #tpu.dot_dimension_numbers<[1], [0], [0], [1], [0, 0, 1, 1], [], []>} : vector<2x32xf32>, vector<32x128xf32>, vector<2x128xf32> -> vector<2x128xf32>
    %133 = arith.addf %14, %132 : vector<2x128xf32>
    %cst_34 = arith.constant 5.000000e-01 : f32
    %134 = vector.broadcast %cst_34 : f32 to vector<2x128xf32>
    %135 = arith.mulf %134, %133 : vector<2x128xf32>
    %136 = math.tanh %135 : vector<2x128xf32>
    %cst_35 = arith.constant 5.000000e-01 : f32
    %137 = vector.broadcast %cst_35 : f32 to vector<2x128xf32>
    %138 = arith.mulf %137, %136 : vector<2x128xf32>
    %cst_36 = arith.constant 5.000000e-01 : f32
    %139 = vector.broadcast %cst_36 : f32 to vector<2x128xf32>
    %140 = arith.addf %138, %139 : vector<2x128xf32>
    %141 = math.tanh %133 : vector<2x128xf32>
    %142 = vector.extract_strided_slice %140 {offsets = [0, 0], sizes = [2, 32], strides = [1, 1]} : vector<2x128xf32> to vector<2x32xf32>
    %143 = vector.extract_strided_slice %140 {offsets = [0, 32], sizes = [2, 32], strides = [1, 1]} : vector<2x128xf32> to vector<2x32xf32>
    %144 = vector.extract_strided_slice %141 {offsets = [0, 64], sizes = [2, 32], strides = [1, 1]} : vector<2x128xf32> to vector<2x32xf32>
    %145 = vector.extract_strided_slice %140 {offsets = [0, 96], sizes = [2, 32], strides = [1, 1]} : vector<2x128xf32> to vector<2x32xf32>
    %146 = arith.mulf %143, %129 : vector<2x32xf32>
    %147 = arith.mulf %142, %144 : vector<2x32xf32>
    %148 = arith.addf %146, %147 : vector<2x32xf32>
    %149 = math.tanh %148 : vector<2x32xf32>
    %150 = arith.mulf %145, %149 : vector<2x32xf32>
    %cst_37 = arith.constant dense<0.000000e+00> : vector<2x128xf32>
    %151 = tpu.matmul %150, %7, %cst_37 {dimension_numbers = #tpu.dot_dimension_numbers<[1], [0], [0], [1], [0, 0, 1, 1], [], []>} : vector<2x32xf32>, vector<32x128xf32>, vector<2x128xf32> -> vector<2x128xf32>
    %152 = arith.addf %15, %151 : vector<2x128xf32>
    %cst_38 = arith.constant 5.000000e-01 : f32
    %153 = vector.broadcast %cst_38 : f32 to vector<2x128xf32>
    %154 = arith.mulf %153, %152 : vector<2x128xf32>
    %155 = math.tanh %154 : vector<2x128xf32>
    %cst_39 = arith.constant 5.000000e-01 : f32
    %156 = vector.broadcast %cst_39 : f32 to vector<2x128xf32>
    %157 = arith.mulf %156, %155 : vector<2x128xf32>
    %cst_40 = arith.constant 5.000000e-01 : f32
    %158 = vector.broadcast %cst_40 : f32 to vector<2x128xf32>
    %159 = arith.addf %157, %158 : vector<2x128xf32>
    %160 = math.tanh %152 : vector<2x128xf32>
    %161 = vector.extract_strided_slice %159 {offsets = [0, 0], sizes = [2, 32], strides = [1, 1]} : vector<2x128xf32> to vector<2x32xf32>
    %162 = vector.extract_strided_slice %159 {offsets = [0, 32], sizes = [2, 32], strides = [1, 1]} : vector<2x128xf32> to vector<2x32xf32>
    %163 = vector.extract_strided_slice %160 {offsets = [0, 64], sizes = [2, 32], strides = [1, 1]} : vector<2x128xf32> to vector<2x32xf32>
    %164 = vector.extract_strided_slice %159 {offsets = [0, 96], sizes = [2, 32], strides = [1, 1]} : vector<2x128xf32> to vector<2x32xf32>
    %165 = arith.mulf %162, %148 : vector<2x32xf32>
    %166 = arith.mulf %161, %163 : vector<2x32xf32>
    %167 = arith.addf %165, %166 : vector<2x32xf32>
    %168 = math.tanh %167 : vector<2x32xf32>
    %169 = arith.mulf %164, %168 : vector<2x32xf32>
    %170 = tpu.concatenate %169, %167 in 1 : vector<2x32xf32>, vector<2x32xf32> -> vector<2x64xf32>
    %c0_41 = arith.constant 0 : index
    %c0_42 = arith.constant 0 : index
    %c0_43 = arith.constant 0 : index
    %171 = vector.load %arg10[%c0_41, %c0_42, %c0_43] : memref<2x2x64xf32, #tpu.memory_space<vmem>>, vector<1x2x64xf32>
    %172 = vector.shape_cast %171 : vector<1x2x64xf32> to vector<2x64xf32>
    %173 = vector.shape_cast %170 : vector<2x64xf32> to vector<1x2x64xf32>
    tpu.vector_store %arg10[%c0_41, %c0_42, %c0_43], %173 {strides = array<i32>} : memref<2x2x64xf32, #tpu.memory_space<vmem>>, vector<1x2x64xf32>,
    %c0_44 = arith.constant 0 : index
    %c0_45 = arith.constant 0 : index
    %174 = vector.load %arg5[%c0_44, %c0_45] : memref<32x128xf32, #tpu.memory_space<vmem>>, vector<32x128xf32>
    %c0_46 = arith.constant 0 : index
    %c0_47 = arith.constant 0 : index
    %175 = vector.load %arg4[%c0_46, %c0_47] : memref<32x128xf32, #tpu.memory_space<vmem>>, vector<32x128xf32>
    %c0_48 = arith.constant 0 : index
    %c0_49 = arith.constant 0 : index
    %176 = vector.load %arg6[%c0_48, %c0_49] : memref<1x128xf32, #tpu.memory_space<vmem>>, vector<1x128xf32>
    %177 = vector.shape_cast %176 : vector<1x128xf32> to vector<1x128xf32>
    %178 = vector.broadcast %177 : vector<1x128xf32> to vector<2x128xf32>
    %cst_50 = arith.constant dense<0.000000e+00> : vector<2x128xf32>
    %179 = tpu.matmul %36, %175, %cst_50 {dimension_numbers = #tpu.dot_dimension_numbers<[1], [0], [0], [1], [0, 0, 1, 1], [], []>} : vector<2x32xf32>, vector<32x128xf32>, vector<2x128xf32> -> vector<2x128xf32>
    %180 = arith.addf %179, %178 : vector<2x128xf32>
    %cst_51 = arith.constant dense<0.000000e+00> : vector<2x128xf32>
    %181 = tpu.matmul %55, %175, %cst_51 {dimension_numbers = #tpu.dot_dimension_numbers<[1], [0], [0], [1], [0, 0, 1, 1], [], []>} : vector<2x32xf32>, vector<32x128xf32>, vector<2x128xf32> -> vector<2x128xf32>
    %182 = arith.addf %181, %178 : vector<2x128xf32>
    %cst_52 = arith.constant dense<0.000000e+00> : vector<2x128xf32>
    %183 = tpu.matmul %74, %175, %cst_52 {dimension_numbers = #tpu.dot_dimension_numbers<[1], [0], [0], [1], [0, 0, 1, 1], [], []>} : vector<2x32xf32>, vector<32x128xf32>, vector<2x128xf32> -> vector<2x128xf32>
    %184 = arith.addf %183, %178 : vector<2x128xf32>
    %cst_53 = arith.constant dense<0.000000e+00> : vector<2x128xf32>
    %185 = tpu.matmul %93, %175, %cst_53 {dimension_numbers = #tpu.dot_dimension_numbers<[1], [0], [0], [1], [0, 0, 1, 1], [], []>} : vector<2x32xf32>, vector<32x128xf32>, vector<2x128xf32> -> vector<2x128xf32>
    %186 = arith.addf %185, %178 : vector<2x128xf32>
    %cst_54 = arith.constant dense<0.000000e+00> : vector<2x128xf32>
    %187 = tpu.matmul %112, %175, %cst_54 {dimension_numbers = #tpu.dot_dimension_numbers<[1], [0], [0], [1], [0, 0, 1, 1], [], []>} : vector<2x32xf32>, vector<32x128xf32>, vector<2x128xf32> -> vector<2x128xf32>
    %188 = arith.addf %187, %178 : vector<2x128xf32>
    %cst_55 = arith.constant dense<0.000000e+00> : vector<2x128xf32>
    %189 = tpu.matmul %131, %175, %cst_55 {dimension_numbers = #tpu.dot_dimension_numbers<[1], [0], [0], [1], [0, 0, 1, 1], [], []>} : vector<2x32xf32>, vector<32x128xf32>, vector<2x128xf32> -> vector<2x128xf32>
    %190 = arith.addf %189, %178 : vector<2x128xf32>
    %cst_56 = arith.constant dense<0.000000e+00> : vector<2x128xf32>
    %191 = tpu.matmul %150, %175, %cst_56 {dimension_numbers = #tpu.dot_dimension_numbers<[1], [0], [0], [1], [0, 0, 1, 1], [], []>} : vector<2x32xf32>, vector<32x128xf32>, vector<2x128xf32> -> vector<2x128xf32>
    %192 = arith.addf %191, %178 : vector<2x128xf32>
    %cst_57 = arith.constant dense<0.000000e+00> : vector<2x128xf32>
    %193 = tpu.matmul %169, %175, %cst_57 {dimension_numbers = #tpu.dot_dimension_numbers<[1], [0], [0], [1], [0, 0, 1, 1], [], []>} : vector<2x32xf32>, vector<32x128xf32>, vector<2x128xf32> -> vector<2x128xf32>
    %194 = arith.addf %193, %178 : vector<2x128xf32>
    %cst_58 = arith.constant 0.000000e+00 : f32
    %195 = vector.broadcast %cst_58 : f32 to vector<2x32xf32>
    %cst_59 = arith.constant 0.000000e+00 : f32
    %196 = vector.broadcast %cst_59 : f32 to vector<2x32xf32>
    %cst_60 = arith.constant dense<0.000000e+00> : vector<2x128xf32>
    %197 = tpu.matmul %195, %174, %cst_60 {dimension_numbers = #tpu.dot_dimension_numbers<[1], [0], [0], [1], [0, 0, 1, 1], [], []>} : vector<2x32xf32>, vector<32x128xf32>, vector<2x128xf32> -> vector<2x128xf32>
    %198 = arith.addf %180, %197 : vector<2x128xf32>
    %cst_61 = arith.constant 5.000000e-01 : f32
    %199 = vector.broadcast %cst_61 : f32 to vector<2x128xf32>
    %200 = arith.mulf %199, %198 : vector<2x128xf32>
    %201 = math.tanh %200 : vector<2x128xf32>
    %cst_62 = arith.constant 5.000000e-01 : f32
    %202 = vector.broadcast %cst_62 : f32 to vector<2x128xf32>
    %203 = arith.mulf %202, %201 : vector<2x128xf32>
    %cst_63 = arith.constant 5.000000e-01 : f32
    %204 = vector.broadcast %cst_63 : f32 to vector<2x128xf32>
    %205 = arith.addf %203, %204 : vector<2x128xf32>
    %206 = math.tanh %198 : vector<2x128xf32>
    %207 = vector.extract_strided_slice %205 {offsets = [0, 0], sizes = [2, 32], strides = [1, 1]} : vector<2x128xf32> to vector<2x32xf32>
    %208 = vector.extract_strided_slice %205 {offsets = [0, 32], sizes = [2, 32], strides = [1, 1]} : vector<2x128xf32> to vector<2x32xf32>
    %209 = vector.extract_strided_slice %206 {offsets = [0, 64], sizes = [2, 32], strides = [1, 1]} : vector<2x128xf32> to vector<2x32xf32>
    %210 = vector.extract_strided_slice %205 {offsets = [0, 96], sizes = [2, 32], strides = [1, 1]} : vector<2x128xf32> to vector<2x32xf32>
    %211 = arith.mulf %208, %196 : vector<2x32xf32>
    %212 = arith.mulf %207, %209 : vector<2x32xf32>
    %213 = arith.addf %211, %212 : vector<2x32xf32>
    %214 = math.tanh %213 : vector<2x32xf32>
    %215 = arith.mulf %210, %214 : vector<2x32xf32>
    %cst_64 = arith.constant dense<0.000000e+00> : vector<2x128xf32>
    %216 = tpu.matmul %215, %174, %cst_64 {dimension_numbers = #tpu.dot_dimension_numbers<[1], [0], [0], [1], [0, 0, 1, 1], [], []>} : vector<2x32xf32>, vector<32x128xf32>, vector<2x128xf32> -> vector<2x128xf32>
    %217 = arith.addf %182, %216 : vector<2x128xf32>
    %cst_65 = arith.constant 5.000000e-01 : f32
    %218 = vector.broadcast %cst_65 : f32 to vector<2x128xf32>
    %219 = arith.mulf %218, %217 : vector<2x128xf32>
    %220 = math.tanh %219 : vector<2x128xf32>
    %cst_66 = arith.constant 5.000000e-01 : f32
    %221 = vector.broadcast %cst_66 : f32 to vector<2x128xf32>
    %222 = arith.mulf %221, %220 : vector<2x128xf32>
    %cst_67 = arith.constant 5.000000e-01 : f32
    %223 = vector.broadcast %cst_67 : f32 to vector<2x128xf32>
    %224 = arith.addf %222, %223 : vector<2x128xf32>
    %225 = math.tanh %217 : vector<2x128xf32>
    %226 = vector.extract_strided_slice %224 {offsets = [0, 0], sizes = [2, 32], strides = [1, 1]} : vector<2x128xf32> to vector<2x32xf32>
    %227 = vector.extract_strided_slice %224 {offsets = [0, 32], sizes = [2, 32], strides = [1, 1]} : vector<2x128xf32> to vector<2x32xf32>
    %228 = vector.extract_strided_slice %225 {offsets = [0, 64], sizes = [2, 32], strides = [1, 1]} : vector<2x128xf32> to vector<2x32xf32>
    %229 = vector.extract_strided_slice %224 {offsets = [0, 96], sizes = [2, 32], strides = [1, 1]} : vector<2x128xf32> to vector<2x32xf32>
    %230 = arith.mulf %227, %213 : vector<2x32xf32>
    %231 = arith.mulf %226, %228 : vector<2x32xf32>
    %232 = arith.addf %230, %231 : vector<2x32xf32>
    %233 = math.tanh %232 : vector<2x32xf32>
    %234 = arith.mulf %229, %233 : vector<2x32xf32>
    %cst_68 = arith.constant dense<0.000000e+00> : vector<2x128xf32>
    %235 = tpu.matmul %234, %174, %cst_68 {dimension_numbers = #tpu.dot_dimension_numbers<[1], [0], [0], [1], [0, 0, 1, 1], [], []>} : vector<2x32xf32>, vector<32x128xf32>, vector<2x128xf32> -> vector<2x128xf32>
    %236 = arith.addf %184, %235 : vector<2x128xf32>
    %cst_69 = arith.constant 5.000000e-01 : f32
    %237 = vector.broadcast %cst_69 : f32 to vector<2x128xf32>
    %238 = arith.mulf %237, %236 : vector<2x128xf32>
    %239 = math.tanh %238 : vector<2x128xf32>
    %cst_70 = arith.constant 5.000000e-01 : f32
    %240 = vector.broadcast %cst_70 : f32 to vector<2x128xf32>
    %241 = arith.mulf %240, %239 : vector<2x128xf32>
    %cst_71 = arith.constant 5.000000e-01 : f32
    %242 = vector.broadcast %cst_71 : f32 to vector<2x128xf32>
    %243 = arith.addf %241, %242 : vector<2x128xf32>
    %244 = math.tanh %236 : vector<2x128xf32>
    %245 = vector.extract_strided_slice %243 {offsets = [0, 0], sizes = [2, 32], strides = [1, 1]} : vector<2x128xf32> to vector<2x32xf32>
    %246 = vector.extract_strided_slice %243 {offsets = [0, 32], sizes = [2, 32], strides = [1, 1]} : vector<2x128xf32> to vector<2x32xf32>
    %247 = vector.extract_strided_slice %244 {offsets = [0, 64], sizes = [2, 32], strides = [1, 1]} : vector<2x128xf32> to vector<2x32xf32>
    %248 = vector.extract_strided_slice %243 {offsets = [0, 96], sizes = [2, 32], strides = [1, 1]} : vector<2x128xf32> to vector<2x32xf32>
    %249 = arith.mulf %246, %232 : vector<2x32xf32>
    %250 = arith.mulf %245, %247 : vector<2x32xf32>
    %251 = arith.addf %249, %250 : vector<2x32xf32>
    %252 = math.tanh %251 : vector<2x32xf32>
    %253 = arith.mulf %248, %252 : vector<2x32xf32>
    %cst_72 = arith.constant dense<0.000000e+00> : vector<2x128xf32>
    %254 = tpu.matmul %253, %174, %cst_72 {dimension_numbers = #tpu.dot_dimension_numbers<[1], [0], [0], [1], [0, 0, 1, 1], [], []>} : vector<2x32xf32>, vector<32x128xf32>, vector<2x128xf32> -> vector<2x128xf32>
    %255 = arith.addf %186, %254 : vector<2x128xf32>
    %cst_73 = arith.constant 5.000000e-01 : f32
    %256 = vector.broadcast %cst_73 : f32 to vector<2x128xf32>
    %257 = arith.mulf %256, %255 : vector<2x128xf32>
    %258 = math.tanh %257 : vector<2x128xf32>
    %cst_74 = arith.constant 5.000000e-01 : f32
    %259 = vector.broadcast %cst_74 : f32 to vector<2x128xf32>
    %260 = arith.mulf %259, %258 : vector<2x128xf32>
    %cst_75 = arith.constant 5.000000e-01 : f32
    %261 = vector.broadcast %cst_75 : f32 to vector<2x128xf32>
    %262 = arith.addf %260, %261 : vector<2x128xf32>
    %263 = math.tanh %255 : vector<2x128xf32>
    %264 = vector.extract_strided_slice %262 {offsets = [0, 0], sizes = [2, 32], strides = [1, 1]} : vector<2x128xf32> to vector<2x32xf32>
    %265 = vector.extract_strided_slice %262 {offsets = [0, 32], sizes = [2, 32], strides = [1, 1]} : vector<2x128xf32> to vector<2x32xf32>
    %266 = vector.extract_strided_slice %263 {offsets = [0, 64], sizes = [2, 32], strides = [1, 1]} : vector<2x128xf32> to vector<2x32xf32>
    %267 = vector.extract_strided_slice %262 {offsets = [0, 96], sizes = [2, 32], strides = [1, 1]} : vector<2x128xf32> to vector<2x32xf32>
    %268 = arith.mulf %265, %251 : vector<2x32xf32>
    %269 = arith.mulf %264, %266 : vector<2x32xf32>
    %270 = arith.addf %268, %269 : vector<2x32xf32>
    %271 = math.tanh %270 : vector<2x32xf32>
    %272 = arith.mulf %267, %271 : vector<2x32xf32>
    %cst_76 = arith.constant dense<0.000000e+00> : vector<2x128xf32>
    %273 = tpu.matmul %272, %174, %cst_76 {dimension_numbers = #tpu.dot_dimension_numbers<[1], [0], [0], [1], [0, 0, 1, 1], [], []>} : vector<2x32xf32>, vector<32x128xf32>, vector<2x128xf32> -> vector<2x128xf32>
    %274 = arith.addf %188, %273 : vector<2x128xf32>
    %cst_77 = arith.constant 5.000000e-01 : f32
    %275 = vector.broadcast %cst_77 : f32 to vector<2x128xf32>
    %276 = arith.mulf %275, %274 : vector<2x128xf32>
    %277 = math.tanh %276 : vector<2x128xf32>
    %cst_78 = arith.constant 5.000000e-01 : f32
    %278 = vector.broadcast %cst_78 : f32 to vector<2x128xf32>
    %279 = arith.mulf %278, %277 : vector<2x128xf32>
    %cst_79 = arith.constant 5.000000e-01 : f32
    %280 = vector.broadcast %cst_79 : f32 to vector<2x128xf32>
    %281 = arith.addf %279, %280 : vector<2x128xf32>
    %282 = math.tanh %274 : vector<2x128xf32>
    %283 = vector.extract_strided_slice %281 {offsets = [0, 0], sizes = [2, 32], strides = [1, 1]} : vector<2x128xf32> to vector<2x32xf32>
    %284 = vector.extract_strided_slice %281 {offsets = [0, 32], sizes = [2, 32], strides = [1, 1]} : vector<2x128xf32> to vector<2x32xf32>
    %285 = vector.extract_strided_slice %282 {offsets = [0, 64], sizes = [2, 32], strides = [1, 1]} : vector<2x128xf32> to vector<2x32xf32>
    %286 = vector.extract_strided_slice %281 {offsets = [0, 96], sizes = [2, 32], strides = [1, 1]} : vector<2x128xf32> to vector<2x32xf32>
    %287 = arith.mulf %284, %270 : vector<2x32xf32>
    %288 = arith.mulf %283, %285 : vector<2x32xf32>
    %289 = arith.addf %287, %288 : vector<2x32xf32>
    %290 = math.tanh %289 : vector<2x32xf32>
    %291 = arith.mulf %286, %290 : vector<2x32xf32>
    %cst_80 = arith.constant dense<0.000000e+00> : vector<2x128xf32>
    %292 = tpu.matmul %291, %174, %cst_80 {dimension_numbers = #tpu.dot_dimension_numbers<[1], [0], [0], [1], [0, 0, 1, 1], [], []>} : vector<2x32xf32>, vector<32x128xf32>, vector<2x128xf32> -> vector<2x128xf32>
    %293 = arith.addf %190, %292 : vector<2x128xf32>
    %cst_81 = arith.constant 5.000000e-01 : f32
    %294 = vector.broadcast %cst_81 : f32 to vector<2x128xf32>
    %295 = arith.mulf %294, %293 : vector<2x128xf32>
    %296 = math.tanh %295 : vector<2x128xf32>
    %cst_82 = arith.constant 5.000000e-01 : f32
    %297 = vector.broadcast %cst_82 : f32 to vector<2x128xf32>
    %298 = arith.mulf %297, %296 : vector<2x128xf32>
    %cst_83 = arith.constant 5.000000e-01 : f32
    %299 = vector.broadcast %cst_83 : f32 to vector<2x128xf32>
    %300 = arith.addf %298, %299 : vector<2x128xf32>
    %301 = math.tanh %293 : vector<2x128xf32>
    %302 = vector.extract_strided_slice %300 {offsets = [0, 0], sizes = [2, 32], strides = [1, 1]} : vector<2x128xf32> to vector<2x32xf32>
    %303 = vector.extract_strided_slice %300 {offsets = [0, 32], sizes = [2, 32], strides = [1, 1]} : vector<2x128xf32> to vector<2x32xf32>
    %304 = vector.extract_strided_slice %301 {offsets = [0, 64], sizes = [2, 32], strides = [1, 1]} : vector<2x128xf32> to vector<2x32xf32>
    %305 = vector.extract_strided_slice %300 {offsets = [0, 96], sizes = [2, 32], strides = [1, 1]} : vector<2x128xf32> to vector<2x32xf32>
    %306 = arith.mulf %303, %289 : vector<2x32xf32>
    %307 = arith.mulf %302, %304 : vector<2x32xf32>
    %308 = arith.addf %306, %307 : vector<2x32xf32>
    %309 = math.tanh %308 : vector<2x32xf32>
    %310 = arith.mulf %305, %309 : vector<2x32xf32>
    %cst_84 = arith.constant dense<0.000000e+00> : vector<2x128xf32>
    %311 = tpu.matmul %310, %174, %cst_84 {dimension_numbers = #tpu.dot_dimension_numbers<[1], [0], [0], [1], [0, 0, 1, 1], [], []>} : vector<2x32xf32>, vector<32x128xf32>, vector<2x128xf32> -> vector<2x128xf32>
    %312 = arith.addf %192, %311 : vector<2x128xf32>
    %cst_85 = arith.constant 5.000000e-01 : f32
    %313 = vector.broadcast %cst_85 : f32 to vector<2x128xf32>
    %314 = arith.mulf %313, %312 : vector<2x128xf32>
    %315 = math.tanh %314 : vector<2x128xf32>
    %cst_86 = arith.constant 5.000000e-01 : f32
    %316 = vector.broadcast %cst_86 : f32 to vector<2x128xf32>
    %317 = arith.mulf %316, %315 : vector<2x128xf32>
    %cst_87 = arith.constant 5.000000e-01 : f32
    %318 = vector.broadcast %cst_87 : f32 to vector<2x128xf32>
    %319 = arith.addf %317, %318 : vector<2x128xf32>
    %320 = math.tanh %312 : vector<2x128xf32>
    %321 = vector.extract_strided_slice %319 {offsets = [0, 0], sizes = [2, 32], strides = [1, 1]} : vector<2x128xf32> to vector<2x32xf32>
    %322 = vector.extract_strided_slice %319 {offsets = [0, 32], sizes = [2, 32], strides = [1, 1]} : vector<2x128xf32> to vector<2x32xf32>
    %323 = vector.extract_strided_slice %320 {offsets = [0, 64], sizes = [2, 32], strides = [1, 1]} : vector<2x128xf32> to vector<2x32xf32>
    %324 = vector.extract_strided_slice %319 {offsets = [0, 96], sizes = [2, 32], strides = [1, 1]} : vector<2x128xf32> to vector<2x32xf32>
    %325 = arith.mulf %322, %308 : vector<2x32xf32>
    %326 = arith.mulf %321, %323 : vector<2x32xf32>
    %327 = arith.addf %325, %326 : vector<2x32xf32>
    %328 = math.tanh %327 : vector<2x32xf32>
    %329 = arith.mulf %324, %328 : vector<2x32xf32>
    %cst_88 = arith.constant dense<0.000000e+00> : vector<2x128xf32>
    %330 = tpu.matmul %329, %174, %cst_88 {dimension_numbers = #tpu.dot_dimension_numbers<[1], [0], [0], [1], [0, 0, 1, 1], [], []>} : vector<2x32xf32>, vector<32x128xf32>, vector<2x128xf32> -> vector<2x128xf32>
    %331 = arith.addf %194, %330 : vector<2x128xf32>
    %cst_89 = arith.constant 5.000000e-01 : f32
    %332 = vector.broadcast %cst_89 : f32 to vector<2x128xf32>
    %333 = arith.mulf %332, %331 : vector<2x128xf32>
    %334 = math.tanh %333 : vector<2x128xf32>
    %cst_90 = arith.constant 5.000000e-01 : f32
    %335 = vector.broadcast %cst_90 : f32 to vector<2x128xf32>
    %336 = arith.mulf %335, %334 : vector<2x128xf32>
    %cst_91 = arith.constant 5.000000e-01 : f32
    %337 = vector.broadcast %cst_91 : f32 to vector<2x128xf32>
    %338 = arith.addf %336, %337 : vector<2x128xf32>
    %339 = math.tanh %331 : vector<2x128xf32>
    %340 = vector.extract_strided_slice %338 {offsets = [0, 0], sizes = [2, 32], strides = [1, 1]} : vector<2x128xf32> to vector<2x32xf32>
    %341 = vector.extract_strided_slice %338 {offsets = [0, 32], sizes = [2, 32], strides = [1, 1]} : vector<2x128xf32> to vector<2x32xf32>
    %342 = vector.extract_strided_slice %339 {offsets = [0, 64], sizes = [2, 32], strides = [1, 1]} : vector<2x128xf32> to vector<2x32xf32>
    %343 = vector.extract_strided_slice %338 {offsets = [0, 96], sizes = [2, 32], strides = [1, 1]} : vector<2x128xf32> to vector<2x32xf32>
    %344 = arith.mulf %341, %327 : vector<2x32xf32>
    %345 = arith.mulf %340, %342 : vector<2x32xf32>
    %346 = arith.addf %344, %345 : vector<2x32xf32>
    %347 = math.tanh %346 : vector<2x32xf32>
    %348 = arith.mulf %343, %347 : vector<2x32xf32>
    %349 = tpu.concatenate %348, %346 in 1 : vector<2x32xf32>, vector<2x32xf32> -> vector<2x64xf32>
    %c1 = arith.constant 1 : index
    %c0_92 = arith.constant 0 : index
    %c0_93 = arith.constant 0 : index
    %350 = vector.load %arg10[%c1, %c0_92, %c0_93] : memref<2x2x64xf32, #tpu.memory_space<vmem>>, vector<1x2x64xf32>
    %351 = vector.shape_cast %350 : vector<1x2x64xf32> to vector<2x64xf32>
    %352 = vector.shape_cast %349 : vector<2x64xf32> to vector<1x2x64xf32>
    tpu.vector_store %arg10[%c1, %c0_92, %c0_93], %352 {strides = array<i32>} : memref<2x2x64xf32, #tpu.memory_space<vmem>>, vector<1x2x64xf32>,
    %c0_94 = arith.constant 0 : index
    %c0_95 = arith.constant 0 : index
    %353 = vector.load %arg7[%c0_94, %c0_95] : memref<32x2xf32, #tpu.memory_space<vmem>>, vector<32x2xf32>
    %cst_96 = arith.constant dense<0.000000e+00> : vector<2x2xf32>
    %354 = tpu.matmul %348, %353, %cst_96 {dimension_numbers = #tpu.dot_dimension_numbers<[1], [0], [0], [1], [0, 0, 1, 1], [], []>} : vector<2x32xf32>, vector<32x2xf32>, vector<2x2xf32> -> vector<2x2xf32>
    %c0_97 = arith.constant 0 : index
    %c0_98 = arith.constant 0 : index
    %355 = vector.load %arg8[%c0_97, %c0_98] : memref<1x2xf32, #tpu.memory_space<vmem>>, vector<1x2xf32>
    %356 = vector.broadcast %355 : vector<1x2xf32> to vector<2x2xf32>
    %357 = arith.addf %354, %356 : vector<2x2xf32>
    %cst_99 = arith.constant 5.000000e-01 : f32
    %358 = vector.broadcast %cst_99 : f32 to vector<2x2xf32>
    %359 = arith.mulf %358, %357 : vector<2x2xf32>
    %360 = math.tanh %359 : vector<2x2xf32>
    %cst_100 = arith.constant 5.000000e-01 : f32
    %361 = vector.broadcast %cst_100 : f32 to vector<2x2xf32>
    %362 = arith.mulf %361, %360 : vector<2x2xf32>
    %cst_101 = arith.constant 5.000000e-01 : f32
    %363 = vector.broadcast %cst_101 : f32 to vector<2x2xf32>
    %364 = arith.addf %362, %363 : vector<2x2xf32>
    %c0_102 = arith.constant 0 : index
    %c0_103 = arith.constant 0 : index
    %365 = vector.load %arg9[%c0_102, %c0_103] : memref<2x2xf32, #tpu.memory_space<vmem>>, vector<2x2xf32>
    tpu.vector_store %arg9[%c0_102, %c0_103], %364 {strides = array<i32>} : memref<2x2xf32, #tpu.memory_space<vmem>>, vector<2x2xf32>,
    return
  }
}

</mosaic_0001>

<llo_original>
// kernel: simple_forward.1
$region0: #{simple_forward.1}
  #allocation0 [shape = 'u32[]', space=smem, size = 0x4, offset = 0x4, fixed_abs, tag = 'smem constant byte address 0x4 - core index']
  #allocation1 [shape = 'u32[144,128]{1,0:T(1,128)}', space=vmem, size = 0x12000, scoped, tag = 'internal scratch']
  %s0 = inlined_call_operand.vmem [shape: f32[16,10], index: 0, kind: input, shape index: {}]
  %s1 = inlined_call_operand.hbm [shape: f32[10,128], index: 1, kind: input, shape index: {}]
  %s2 = inlined_call_operand.vmem [shape: f32[32,128], index: 2, kind: input, shape index: {}]
  %s3 = inlined_call_operand.hbm [shape: f32[1,128], index: 3, kind: input, shape index: {}]
  %s4 = inlined_call_operand.vmem [shape: f32[32,128], index: 4, kind: input, shape index: {}]
  %s5 = inlined_call_operand.vmem [shape: f32[32,128], index: 5, kind: input, shape index: {}]
  %s6 = inlined_call_operand.vmem [shape: f32[1,128], index: 6, kind: input, shape index: {}]
  %s7 = inlined_call_operand.vmem [shape: f32[32,2], index: 7, kind: input, shape index: {}]
  %s8 = inlined_call_operand.hbm [shape: f32[1,2], index: 8, kind: input, shape index: {}]
  %s9 = inlined_call_operand.hbm [shape: f32[2,2], index: 9, kind: output, shape index: {0}]
  %s10 = inlined_call_operand.vmem [shape: f32[2,2,64], index: 10, kind: output, shape index: {1}]
  %11 = xla_tuple %s9, %s10
  %s12 = sld [smem:[#allocation0]]
  $region66: #{simple_forward.1} parent=0
    _
  %s14 = ssub.s32 1, %s12
  %s15 = scalar_select 0, %s14, %s12
  $region1: #{simple_forward.1} parent=0
    #allocation2 [shape = 'u8[8192]{0}', space=vmem, size = 0x2000, scoped, tag = 'input window, operand 1, single buffered']
    #allocation3 [shape = 's32[1]{0}', space=sflag, size = 0x4, scoped, tag = 'scoped memory for simple_forward.1']
    #allocation4 [shape = 's32[1]{0}', space=sflag, size = 0x4, scoped, tag = 'scoped memory for simple_forward.1']
    #allocation5 [shape = 'u8[512]{0}', space=vmem, size = 0x400, scoped, tag = 'input window, operand 3, single buffered']
    #allocation6 [shape = 's32[1]{0}', space=sflag, size = 0x4, scoped, tag = 'scoped memory for simple_forward.1']
    #allocation7 [shape = 'u8[512]{0}', space=vmem, size = 0x400, scoped, tag = 'input window, operand 8, single buffered']
    #allocation8 [shape = 'u8[1024]{0}', space=vmem, size = 0x400, scoped, tag = 'output window, operand 0, single buffered']
    %16 = vsyncpa [#allocation3], 0
    %17 = vsyncpa [#allocation6], 0
    %18 = vsyncpa [#allocation4], 0
    // Predicated region
    $region2: #{simple_forward.1} parent=1 // pred_check
      _
    $region3: #{simple_forward.1} parent=1 // pred_check_branch
      %20 = sbr.rel (0) target = $region5
    $region4: #{simple_forward.1} parent=1 // pred_region
      _
    $region5: #{simple_forward.1} parent=1 // pred_fallthru
      _
    // Predicated region
    $region6: #{simple_forward.1} parent=1 // pred_check
      _
    $region7: #{simple_forward.1} parent=1 // pred_check_branch
      %22 = sbr.rel (0) target = $region9
    $region8: #{simple_forward.1} parent=1 // pred_region
      %s24 = ssub.s32 256, 256
      %25 = vsyncadd [#allocation3], %s24
      %s26 = sshll.u32 [#allocation2], 4
      %s27 = int_to_ptr.vmem [resolvable:$true] %s26
      %32 = dma.hbm_to_vmem [thread:$0]  %s1, 256, %s27, [#allocation3], 128, 128, 8
    $region9: #{simple_forward.1} parent=1 // pred_fallthru
      _
    // Predicated region
    $region10: #{simple_forward.1} parent=1 // pred_check
      _
    $region11: #{simple_forward.1} parent=1 // pred_check_branch
      %34 = sbr.rel (0) target = $region13
    $region12: #{simple_forward.1} parent=1 // pred_region
      _
    $region13: #{simple_forward.1} parent=1 // pred_fallthru
      _
    // Predicated region
    $region14: #{simple_forward.1} parent=1 // pred_check
      _
    $region15: #{simple_forward.1} parent=1 // pred_check_branch
      %36 = sbr.rel (0) target = $region17
    $region16: #{simple_forward.1} parent=1 // pred_region
      %s38 = ssub.s32 16, 16
      %39 = vsyncadd [#allocation6], %s38
      %s41 = sshll.u32 [#allocation5], 4
      %s42 = int_to_ptr.vmem [resolvable:$true] %s41
      %44 = dma.hbm_to_vmem [thread:$0]  %s3, 16, %s42, [#allocation6]
    $region17: #{simple_forward.1} parent=1 // pred_fallthru
      _
    // Predicated region
    $region18: #{simple_forward.1} parent=1 // pred_check
      _
    $region19: #{simple_forward.1} parent=1 // pred_check_branch
      %46 = sbr.rel (0) target = $region21
    $region20: #{simple_forward.1} parent=1 // pred_region
      _
    $region21: #{simple_forward.1} parent=1 // pred_fallthru
      _
    // Predicated region
    $region22: #{simple_forward.1} parent=1 // pred_check
      _
    $region23: #{simple_forward.1} parent=1 // pred_check_branch
      %48 = sbr.rel (0) target = $region25
    $region24: #{simple_forward.1} parent=1 // pred_region
      _
    $region25: #{simple_forward.1} parent=1 // pred_fallthru
      _
    // Predicated region
    $region26: #{simple_forward.1} parent=1 // pred_check
      _
    $region27: #{simple_forward.1} parent=1 // pred_check_branch
      %50 = sbr.rel (0) target = $region29
    $region28: #{simple_forward.1} parent=1 // pred_region
      _
    $region29: #{simple_forward.1} parent=1 // pred_fallthru
      _
    // Predicated region
    $region30: #{simple_forward.1} parent=1 // pred_check
      _
    $region31: #{simple_forward.1} parent=1 // pred_check_branch
      %52 = sbr.rel (0) target = $region33
    $region32: #{simple_forward.1} parent=1 // pred_region
      _
    $region33: #{simple_forward.1} parent=1 // pred_fallthru
      _
    // Predicated region
    $region34: #{simple_forward.1} parent=1 // pred_check
      _
    $region35: #{simple_forward.1} parent=1 // pred_check_branch
      %54 = sbr.rel (0) target = $region37
    $region36: #{simple_forward.1} parent=1 // pred_region
      %s56 = ssub.s32 16, 16
      %57 = vsyncadd [#allocation6], %s56
      %s59 = sshll.u32 [#allocation7], 4
      %s60 = int_to_ptr.vmem [resolvable:$true] %s59
      %62 = dma.hbm_to_vmem [thread:$0]  %s8, 16, %s60, [#allocation6]
    $region37: #{simple_forward.1} parent=1 // pred_fallthru
      _
    // Predicated region
    $region38: #{simple_forward.1} parent=1 // pred_check
      _
    $region39: #{simple_forward.1} parent=1 // pred_check_branch
      %64 = sbr.rel (0) target = $region41
    $region40: #{simple_forward.1} parent=1 // pred_region
      %65 = dma.done [#allocation3], 256
    $region41: #{simple_forward.1} parent=1 // pred_fallthru
      _
    // Predicated region
    $region42: #{simple_forward.1} parent=1 // pred_check
      _
    $region43: #{simple_forward.1} parent=1 // pred_check_branch
      %67 = sbr.rel (0) target = $region45
    $region44: #{simple_forward.1} parent=1 // pred_region
      %68 = dma.done [#allocation6], 16
    $region45: #{simple_forward.1} parent=1 // pred_fallthru
      _
    // Predicated region
    $region46: #{simple_forward.1} parent=1 // pred_check
      _
    $region47: #{simple_forward.1} parent=1 // pred_check_branch
      %70 = sbr.rel (0) target = $region49
    $region48: #{simple_forward.1} parent=1 // pred_region
      %71 = dma.done [#allocation6], 16
    $region49: #{simple_forward.1} parent=1 // pred_fallthru
      _
    %v72 = vld [vmem:[#allocation2] sm:$0xff]
    %v73 = vld [vmem:[#allocation2 + $0x8] sm:$0x3]
    %v74 = vld [vmem:[#allocation5] sm:$0x1]
    %v76 = vlaneseq
    %v77 = vshrl.u32 %v76, 7
    %v78 = vsub.s32 0, %v77
    %v79 = vrot.slane %v74, %v78
    %v81 = vld [vmem:[%s0] sm:$0xff]
    %v82 = vld [vmem:[%s0 + $0x8] sm:$0xff]
    %vm83 = vcmask 80896
    %v85 = vsel %vm83, %v81, 0
    %v88 = vsel %vm83, %v82, 0
    %vm90 = vcmask 1041408
    %v92 = vsel %vm90, %v73, 0
    %94 = vmatprep.subr.mxu0 0.0
    %95 = vmatpush1.msra.mxu0 %v72
    %96 = vmatprep.subr.mxu0 0.0
    %97 = vmatpush1.msra.mxu0 %v92
    %98 = vmatprep.subr.mxu0 0.0
    %99 = vmatpush1.msra.mxu0 0.0
    %100 = vmatprep.subr.mxu0 0.0
    %101 = vmatpush1.msra.mxu0 0.0
    %102 = vmatprep.subr.mxu0 0.0
    %103 = vmatpush1.msra.mxu0 0.0
    %104 = vmatprep.subr.mxu0 0.0
    %105 = vmatpush1.msra.mxu0 0.0
    %106 = vmatprep.subr.mxu0 0.0
    %107 = vmatpush1.msra.mxu0 0.0
    %108 = vmatprep.subr.mxu0 0.0
    %109 = vmatpush1.msra.mxu0 0.0
    %110 = vmatprep.subr.mxu0 0.0
    %111 = vmatpush1.msra.mxu0 0.0
    %112 = vmatprep.subr.mxu0 0.0
    %113 = vmatpush1.msra.mxu0 0.0
    %114 = vmatprep.subr.mxu0 0.0
    %115 = vmatpush1.msra.mxu0 0.0
    %116 = vmatprep.subr.mxu0 0.0
    %117 = vmatpush1.msra.mxu0 0.0
    %118 = vmatprep.subr.mxu0 0.0
    %119 = vmatpush1.msra.mxu0 0.0
    %120 = vmatprep.subr.mxu0 0.0
    %121 = vmatpush1.msra.mxu0 0.0
    %122 = vmatprep.subr.mxu0 0.0
    %123 = vmatpush1.msra.mxu0 0.0
    %124 = vmatprep.subr.mxu0 0.0
    %125 = vmatpush1.msra.mxu0 0.0
    %126 = vmatprep.subr.mxu0 0.0
    %127 = vmatpush1.msra.mxu0 0.0
    %128 = vmatprep.subr.mxu0 0.0
    %129 = vmatpush1.msra.mxu0 0.0
    %130 = vmatprep.subr.mxu0 0.0
    %131 = vmatpush1.msra.mxu0 0.0
    %132 = vmatprep.subr.mxu0 0.0
    %133 = vmatpush1.msra.mxu0 0.0
    %134 = vmatprep.subr.mxu0 0.0
    %135 = vmatpush1.msra.mxu0 0.0
    %136 = vmatprep.subr.mxu0 0.0
    %137 = vmatpush1.msra.mxu0 0.0
    %138 = vmatprep.subr.mxu0 0.0
    %139 = vmatpush1.msra.mxu0 0.0
    %140 = vmatprep.subr.mxu0 0.0
    %141 = vmatpush1.msra.mxu0 0.0
    %142 = vmatprep.subr.mxu0 0.0
    %143 = vmatpush1.msra.mxu0 0.0
    %144 = vmatprep.subr.mxu0 0.0
    %145 = vmatpush1.msra.mxu0 0.0
    %146 = vmatprep.subr.mxu0 0.0
    %147 = vmatpush1.msra.mxu0 0.0
    %148 = vmatprep.subr.mxu0 0.0
    %149 = vmatpush1.msra.mxu0 0.0
    %150 = vmatprep.subr.mxu0 0.0
    %151 = vmatpush1.msra.mxu0 0.0
    %152 = vmatprep.subr.mxu0 0.0
    %153 = vmatpush1.msra.mxu0 0.0
    %154 = vmatprep.subr.mxu0 0.0
    %155 = vmatpush1.msra.mxu0 0.0
    %156 = vmatprep.subr.mxu0 0.0
    %157 = vmatpush1.msra.mxu0 0.0
    %158 = vmatprep.mubr.f32.mxu0 0.0
    %159 = vmatmul.mubr.f32.gmra.mrb[0].mxu0 %v85
    %v160 = vpop.f32.mrb[0].mxu0
    %v161 = vadd.f32 %v79, %v160
    %v162 = vpop.f32.mrb[0].mxu0
    %163 = vmatprep.mubr.f32.mxu0 0.0
    %164 = vmatmul.mubr.f32.gmra.mrb[0].mxu0 %v88
    %v165 = vpop.f32.mrb[0].mxu0
    %v166 = vadd.f32 %v79, %v165
    %v167 = vpop.f32.mrb[0].mxu0
    %168 = vdwg.mxu0
    %v169 = vld [vmem:[%s2] sm:$0xff]
    %v170 = vld [vmem:[%s2 + $0x8] sm:$0xff]
    %v171 = vld [vmem:[%s2 + $0x10] sm:$0xff]
    %v172 = vld [vmem:[%s2 + $0x18] sm:$0xff]
    %vm173 = vcmask 261120
    %v175 = vsel %vm173, 0.0, 0
    %177 = vmatprep.subr.mxu0 0.0
    %178 = vmatpush1.msra.mxu0 %v169
    %179 = vmatprep.subr.mxu0 0.0
    %180 = vmatpush1.msra.mxu0 %v170
    %181 = vmatprep.subr.mxu0 0.0
    %182 = vmatpush1.msra.mxu0 %v171
    %183 = vmatprep.subr.mxu0 0.0
    %184 = vmatpush1.msra.mxu0 %v172
    %185 = vmatprep.subr.mxu0 0.0
    %186 = vmatpush1.msra.mxu0 0.0
    %187 = vmatprep.subr.mxu0 0.0
    %188 = vmatpush1.msra.mxu0 0.0
    %189 = vmatprep.subr.mxu0 0.0
    %190 = vmatpush1.msra.mxu0 0.0
    %191 = vmatprep.subr.mxu0 0.0
    %192 = vmatpush1.msra.mxu0 0.0
    %193 = vmatprep.subr.mxu0 0.0
    %194 = vmatpush1.msra.mxu0 0.0
    %195 = vmatprep.subr.mxu0 0.0
    %196 = vmatpush1.msra.mxu0 0.0
    %197 = vmatprep.subr.mxu0 0.0
    %198 = vmatpush1.msra.mxu0 0.0
    %199 = vmatprep.subr.mxu0 0.0
    %200 = vmatpush1.msra.mxu0 0.0
    %201 = vmatprep.subr.mxu0 0.0
    %202 = vmatpush1.msra.mxu0 0.0
    %203 = vmatprep.subr.mxu0 0.0
    %204 = vmatpush1.msra.mxu0 0.0
    %205 = vmatprep.subr.mxu0 0.0
    %206 = vmatpush1.msra.mxu0 0.0
    %207 = vmatprep.subr.mxu0 0.0
    %208 = vmatpush1.msra.mxu0 0.0
    %209 = vmatprep.subr.mxu0 0.0
    %210 = vmatpush1.msra.mxu0 0.0
    %211 = vmatprep.subr.mxu0 0.0
    %212 = vmatpush1.msra.mxu0 0.0
    %213 = vmatprep.subr.mxu0 0.0
    %214 = vmatpush1.msra.mxu0 0.0
    %215 = vmatprep.subr.mxu0 0.0
    %216 = vmatpush1.msra.mxu0 0.0
    %217 = vmatprep.subr.mxu0 0.0
    %218 = vmatpush1.msra.mxu0 0.0
    %219 = vmatprep.subr.mxu0 0.0
    %220 = vmatpush1.msra.mxu0 0.0
    %221 = vmatprep.subr.mxu0 0.0
    %222 = vmatpush1.msra.mxu0 0.0
    %223 = vmatprep.subr.mxu0 0.0
    %224 = vmatpush1.msra.mxu0 0.0
    %225 = vmatprep.subr.mxu0 0.0
    %226 = vmatpush1.msra.mxu0 0.0
    %227 = vmatprep.subr.mxu0 0.0
    %228 = vmatpush1.msra.mxu0 0.0
    %229 = vmatprep.subr.mxu0 0.0
    %230 = vmatpush1.msra.mxu0 0.0
    %231 = vmatprep.subr.mxu0 0.0
    %232 = vmatpush1.msra.mxu0 0.0
    %233 = vmatprep.subr.mxu0 0.0
    %234 = vmatpush1.msra.mxu0 0.0
    %235 = vmatprep.subr.mxu0 0.0
    %236 = vmatpush1.msra.mxu0 0.0
    %237 = vmatprep.subr.mxu0 0.0
    %238 = vmatpush1.msra.mxu0 0.0
    %239 = vmatprep.subr.mxu0 0.0
    %240 = vmatpush1.msra.mxu0 0.0
    %241 = vmatprep.mubr.f32.mxu0 0.0
    %242 = vmatmul.mubr.f32.gmra.mrb[0].mxu0 %v175
    %v243 = vpop.f32.mrb[0].mxu0
    %v244 = vadd.f32 0.0, %v243
    %v245 = vpop.f32.mrb[0].mxu0
    %246 = vdwg.mxu0
    %v247 = vadd.f32 %v161, %v244
    %v248 = vmul.f32 %v247, 0.5
    %v249 = vtanh.pop %v248
    %v250 = vmul.f32 %v249, 0.5
    %v251 = vadd.f32 %v250, 0.5
    %v252 = vtanh.pop %v247
    %v253 = vmul.f32 %v251, 0.0
    %255 = vrot.lane.b32.xlu0 %v252, 64
    %v256 = vpop.permute.xlu0 %255
    %v258 = vmul.f32 %v251, %v256
    %260 = vrot.lane.b32.xlu0 %v258, 32
    %v261 = vpop.permute.xlu0 %260
    %v263 = vadd.f32 %v253, %v261
    %v264 = vtanh.pop %v263
    %266 = vrot.lane.b32.xlu0 %v264, 64
    %v267 = vpop.permute.xlu0 %266
    %v269 = vmul.f32 %v251, %v267
    %271 = vrot.lane.b32.xlu0 %v269, 32
    %v272 = vpop.permute.xlu0 %271
    %v273 = vsel %vm173, %v272, 0
    %275 = vmatprep.subr.mxu0 0.0
    %276 = vmatpush1.msra.mxu0 %v169
    %277 = vmatprep.subr.mxu0 0.0
    %278 = vmatpush1.msra.mxu0 %v170
    %279 = vmatprep.subr.mxu0 0.0
    %280 = vmatpush1.msra.mxu0 %v171
    %281 = vmatprep.subr.mxu0 0.0
    %282 = vmatpush1.msra.mxu0 %v172
    %283 = vmatprep.subr.mxu0 0.0
    %284 = vmatpush1.msra.mxu0 0.0
    %285 = vmatprep.subr.mxu0 0.0
    %286 = vmatpush1.msra.mxu0 0.0
    %287 = vmatprep.subr.mxu0 0.0
    %288 = vmatpush1.msra.mxu0 0.0
    %289 = vmatprep.subr.mxu0 0.0
    %290 = vmatpush1.msra.mxu0 0.0
    %291 = vmatprep.subr.mxu0 0.0
    %292 = vmatpush1.msra.mxu0 0.0
    %293 = vmatprep.subr.mxu0 0.0
    %294 = vmatpush1.msra.mxu0 0.0
    %295 = vmatprep.subr.mxu0 0.0
    %296 = vmatpush1.msra.mxu0 0.0
    %297 = vmatprep.subr.mxu0 0.0
    %298 = vmatpush1.msra.mxu0 0.0
    %299 = vmatprep.subr.mxu0 0.0
    %300 = vmatpush1.msra.mxu0 0.0
    %301 = vmatprep.subr.mxu0 0.0
    %302 = vmatpush1.msra.mxu0 0.0
    %303 = vmatprep.subr.mxu0 0.0
    %304 = vmatpush1.msra.mxu0 0.0
    %305 = vmatprep.subr.mxu0 0.0
    %306 = vmatpush1.msra.mxu0 0.0
    %307 = vmatprep.subr.mxu0 0.0
    %308 = vmatpush1.msra.mxu0 0.0
    %309 = vmatprep.subr.mxu0 0.0
    %310 = vmatpush1.msra.mxu0 0.0
    %311 = vmatprep.subr.mxu0 0.0
    %312 = vmatpush1.msra.mxu0 0.0
    %313 = vmatprep.subr.mxu0 0.0
    %314 = vmatpush1.msra.mxu0 0.0
    %315 = vmatprep.subr.mxu0 0.0
    %316 = vmatpush1.msra.mxu0 0.0
    %317 = vmatprep.subr.mxu0 0.0
    %318 = vmatpush1.msra.mxu0 0.0
    %319 = vmatprep.subr.mxu0 0.0
    %320 = vmatpush1.msra.mxu0 0.0
    %321 = vmatprep.subr.mxu0 0.0
    %322 = vmatpush1.msra.mxu0 0.0
    %323 = vmatprep.subr.mxu0 0.0
    %324 = vmatpush1.msra.mxu0 0.0
    %325 = vmatprep.subr.mxu0 0.0
    %326 = vmatpush1.msra.mxu0 0.0
    %327 = vmatprep.subr.mxu0 0.0
    %328 = vmatpush1.msra.mxu0 0.0
    %329 = vmatprep.subr.mxu0 0.0
    %330 = vmatpush1.msra.mxu0 0.0
    %331 = vmatprep.subr.mxu0 0.0
    %332 = vmatpush1.msra.mxu0 0.0
    %333 = vmatprep.subr.mxu0 0.0
    %334 = vmatpush1.msra.mxu0 0.0
    %335 = vmatprep.subr.mxu0 0.0
    %336 = vmatpush1.msra.mxu0 0.0
    %337 = vmatprep.subr.mxu0 0.0
    %338 = vmatpush1.msra.mxu0 0.0
    %339 = vmatprep.mubr.f32.mxu0 0.0
    %340 = vmatmul.mubr.f32.gmra.mrb[0].mxu0 %v273
    %v341 = vpop.f32.mrb[0].mxu0
    %v342 = vadd.f32 0.0, %v341
    %v343 = vpop.f32.mrb[0].mxu0
    %344 = vdwg.mxu0
    %v346 = vrot.slane %v342, 6
    %v348 = vadd.f32 %v161, %v346
    %v349 = vmul.f32 %v348, 0.5
    %v350 = vtanh.pop %v349
    %v351 = vmul.f32 %v350, 0.5
    %v352 = vadd.f32 %v351, 0.5
    %v353 = vtanh.pop %v348
    %v355 = vrot.slane %v263, 6
    %v357 = vmul.f32 %v352, %v355
    %359 = vrot.lane.b32.xlu0 %v353, 64
    %v360 = vpop.permute.xlu0 %359
    %v362 = vmul.f32 %v352, %v360
    %364 = vrot.lane.b32.xlu0 %v362, 32
    %v365 = vpop.permute.xlu0 %364
    %v367 = vadd.f32 %v357, %v365
    %v368 = vtanh.pop %v367
    %370 = vrot.lane.b32.xlu0 %v368, 64
    %v371 = vpop.permute.xlu0 %370
    %v373 = vmul.f32 %v352, %v371
    %v375 = vrot.slane %v373, 2
    %376 = vrot.lane.b32.xlu0 %v375, 32
    %v377 = vpop.permute.xlu0 %376
    %v378 = vsel %vm173, %v377, 0
    %380 = vmatprep.subr.mxu0 0.0
    %381 = vmatpush1.msra.mxu0 %v169
    %382 = vmatprep.subr.mxu0 0.0
    %383 = vmatpush1.msra.mxu0 %v170
    %384 = vmatprep.subr.mxu0 0.0
    %385 = vmatpush1.msra.mxu0 %v171
    %386 = vmatprep.subr.mxu0 0.0
    %387 = vmatpush1.msra.mxu0 %v172
    %388 = vmatprep.subr.mxu0 0.0
    %389 = vmatpush1.msra.mxu0 0.0
    %390 = vmatprep.subr.mxu0 0.0
    %391 = vmatpush1.msra.mxu0 0.0
    %392 = vmatprep.subr.mxu0 0.0
    %393 = vmatpush1.msra.mxu0 0.0
    %394 = vmatprep.subr.mxu0 0.0
    %395 = vmatpush1.msra.mxu0 0.0
    %396 = vmatprep.subr.mxu0 0.0
    %397 = vmatpush1.msra.mxu0 0.0
    %398 = vmatprep.subr.mxu0 0.0
    %399 = vmatpush1.msra.mxu0 0.0
    %400 = vmatprep.subr.mxu0 0.0
    %401 = vmatpush1.msra.mxu0 0.0
    %402 = vmatprep.subr.mxu0 0.0
    %403 = vmatpush1.msra.mxu0 0.0
    %404 = vmatprep.subr.mxu0 0.0
    %405 = vmatpush1.msra.mxu0 0.0
    %406 = vmatprep.subr.mxu0 0.0
    %407 = vmatpush1.msra.mxu0 0.0
    %408 = vmatprep.subr.mxu0 0.0
    %409 = vmatpush1.msra.mxu0 0.0
    %410 = vmatprep.subr.mxu0 0.0
    %411 = vmatpush1.msra.mxu0 0.0
    %412 = vmatprep.subr.mxu0 0.0
    %413 = vmatpush1.msra.mxu0 0.0
    %414 = vmatprep.subr.mxu0 0.0
    %415 = vmatpush1.msra.mxu0 0.0
    %416 = vmatprep.subr.mxu0 0.0
    %417 = vmatpush1.msra.mxu0 0.0
    %418 = vmatprep.subr.mxu0 0.0
    %419 = vmatpush1.msra.mxu0 0.0
    %420 = vmatprep.subr.mxu0 0.0
    %421 = vmatpush1.msra.mxu0 0.0
    %422 = vmatprep.subr.mxu0 0.0
    %423 = vmatpush1.msra.mxu0 0.0
    %424 = vmatprep.subr.mxu0 0.0
    %425 = vmatpush1.msra.mxu0 0.0
    %426 = vmatprep.subr.mxu0 0.0
    %427 = vmatpush1.msra.mxu0 0.0
    %428 = vmatprep.subr.mxu0 0.0
    %429 = vmatpush1.msra.mxu0 0.0
    %430 = vmatprep.subr.mxu0 0.0
    %431 = vmatpush1.msra.mxu0 0.0
    %432 = vmatprep.subr.mxu0 0.0
    %433 = vmatpush1.msra.mxu0 0.0
    %434 = vmatprep.subr.mxu0 0.0
    %435 = vmatpush1.msra.mxu0 0.0
    %436 = vmatprep.subr.mxu0 0.0
    %437 = vmatpush1.msra.mxu0 0.0
    %438 = vmatprep.subr.mxu0 0.0
    %439 = vmatpush1.msra.mxu0 0.0
    %440 = vmatprep.subr.mxu0 0.0
    %441 = vmatpush1.msra.mxu0 0.0
    %442 = vmatprep.subr.mxu0 0.0
    %443 = vmatpush1.msra.mxu0 0.0
    %444 = vmatprep.mubr.f32.mxu0 0.0
    %445 = vmatmul.mubr.f32.gmra.mrb[0].mxu0 %v378
    %v446 = vpop.f32.mrb[0].mxu0
    %v447 = vadd.f32 0.0, %v446
    %v448 = vpop.f32.mrb[0].mxu0
    %449 = vdwg.mxu0
    %v451 = vrot.slane %v447, 4
    %v453 = vadd.f32 %v161, %v451
    %v454 = vmul.f32 %v453, 0.5
    %v455 = vtanh.pop %v454
    %v456 = vmul.f32 %v455, 0.5
    %v457 = vadd.f32 %v456, 0.5
    %v458 = vtanh.pop %v453
    %v460 = vrot.slane %v367, 6
    %v462 = vmul.f32 %v457, %v460
    %464 = vrot.lane.b32.xlu0 %v458, 64
    %v465 = vpop.permute.xlu0 %464
    %v467 = vmul.f32 %v457, %v465
    %469 = vrot.lane.b32.xlu0 %v467, 32
    %v470 = vpop.permute.xlu0 %469
    %v472 = vadd.f32 %v462, %v470
    %v473 = vtanh.pop %v472
    %475 = vrot.lane.b32.xlu0 %v473, 64
    %v476 = vpop.permute.xlu0 %475
    %v478 = vmul.f32 %v457, %v476
    %v480 = vrot.slane %v478, 4
    %481 = vrot.lane.b32.xlu0 %v480, 32
    %v482 = vpop.permute.xlu0 %481
    %v483 = vsel %vm173, %v482, 0
    %485 = vmatprep.subr.mxu0 0.0
    %486 = vmatpush1.msra.mxu0 %v169
    %487 = vmatprep.subr.mxu0 0.0
    %488 = vmatpush1.msra.mxu0 %v170
    %489 = vmatprep.subr.mxu0 0.0
    %490 = vmatpush1.msra.mxu0 %v171
    %491 = vmatprep.subr.mxu0 0.0
    %492 = vmatpush1.msra.mxu0 %v172
    %493 = vmatprep.subr.mxu0 0.0
    %494 = vmatpush1.msra.mxu0 0.0
    %495 = vmatprep.subr.mxu0 0.0
    %496 = vmatpush1.msra.mxu0 0.0
    %497 = vmatprep.subr.mxu0 0.0
    %498 = vmatpush1.msra.mxu0 0.0
    %499 = vmatprep.subr.mxu0 0.0
    %500 = vmatpush1.msra.mxu0 0.0
    %501 = vmatprep.subr.mxu0 0.0
    %502 = vmatpush1.msra.mxu0 0.0
    %503 = vmatprep.subr.mxu0 0.0
    %504 = vmatpush1.msra.mxu0 0.0
    %505 = vmatprep.subr.mxu0 0.0
    %506 = vmatpush1.msra.mxu0 0.0
    %507 = vmatprep.subr.mxu0 0.0
    %508 = vmatpush1.msra.mxu0 0.0
    %509 = vmatprep.subr.mxu0 0.0
    %510 = vmatpush1.msra.mxu0 0.0
    %511 = vmatprep.subr.mxu0 0.0
    %512 = vmatpush1.msra.mxu0 0.0
    %513 = vmatprep.subr.mxu0 0.0
    %514 = vmatpush1.msra.mxu0 0.0
    %515 = vmatprep.subr.mxu0 0.0
    %516 = vmatpush1.msra.mxu0 0.0
    %517 = vmatprep.subr.mxu0 0.0
    %518 = vmatpush1.msra.mxu0 0.0
    %519 = vmatprep.subr.mxu0 0.0
    %520 = vmatpush1.msra.mxu0 0.0
    %521 = vmatprep.subr.mxu0 0.0
    %522 = vmatpush1.msra.mxu0 0.0
    %523 = vmatprep.subr.mxu0 0.0
    %524 = vmatpush1.msra.mxu0 0.0
    %525 = vmatprep.subr.mxu0 0.0
    %526 = vmatpush1.msra.mxu0 0.0
    %527 = vmatprep.subr.mxu0 0.0
    %528 = vmatpush1.msra.mxu0 0.0
    %529 = vmatprep.subr.mxu0 0.0
    %530 = vmatpush1.msra.mxu0 0.0
    %531 = vmatprep.subr.mxu0 0.0
    %532 = vmatpush1.msra.mxu0 0.0
    %533 = vmatprep.subr.mxu0 0.0
    %534 = vmatpush1.msra.mxu0 0.0
    %535 = vmatprep.subr.mxu0 0.0
    %536 = vmatpush1.msra.mxu0 0.0
    %537 = vmatprep.subr.mxu0 0.0
    %538 = vmatpush1.msra.mxu0 0.0
    %539 = vmatprep.subr.mxu0 0.0
    %540 = vmatpush1.msra.mxu0 0.0
    %541 = vmatprep.subr.mxu0 0.0
    %542 = vmatpush1.msra.mxu0 0.0
    %543 = vmatprep.subr.mxu0 0.0
    %544 = vmatpush1.msra.mxu0 0.0
    %545 = vmatprep.subr.mxu0 0.0
    %546 = vmatpush1.msra.mxu0 0.0
    %547 = vmatprep.subr.mxu0 0.0
    %548 = vmatpush1.msra.mxu0 0.0
    %549 = vmatprep.mubr.f32.mxu0 0.0
    %550 = vmatmul.mubr.f32.gmra.mrb[0].mxu0 %v483
    %v551 = vpop.f32.mrb[0].mxu0
    %v552 = vadd.f32 0.0, %v551
    %v553 = vpop.f32.mrb[0].mxu0
    %554 = vdwg.mxu0
    %v556 = vrot.slane %v552, 2
    %v558 = vadd.f32 %v161, %v556
    %v559 = vmul.f32 %v558, 0.5
    %v560 = vtanh.pop %v559
    %v561 = vmul.f32 %v560, 0.5
    %v562 = vadd.f32 %v561, 0.5
    %v563 = vtanh.pop %v558
    %v565 = vrot.slane %v472, 6
    %v567 = vmul.f32 %v562, %v565
    %569 = vrot.lane.b32.xlu0 %v563, 64
    %v570 = vpop.permute.xlu0 %569
    %v572 = vmul.f32 %v562, %v570
    %574 = vrot.lane.b32.xlu0 %v572, 32
    %v575 = vpop.permute.xlu0 %574
    %v577 = vadd.f32 %v567, %v575
    %v578 = vtanh.pop %v577
    %580 = vrot.lane.b32.xlu0 %v578, 64
    %v581 = vpop.permute.xlu0 %580
    %v583 = vmul.f32 %v562, %v581
    %v585 = vrot.slane %v583, 6
    %586 = vrot.lane.b32.xlu0 %v585, 32
    %v587 = vpop.permute.xlu0 %586
    %v588 = vsel %vm173, %v587, 0
    %590 = vmatprep.subr.mxu0 0.0
    %591 = vmatpush1.msra.mxu0 %v169
    %592 = vmatprep.subr.mxu0 0.0
    %593 = vmatpush1.msra.mxu0 %v170
    %594 = vmatprep.subr.mxu0 0.0
    %595 = vmatpush1.msra.mxu0 %v171
    %596 = vmatprep.subr.mxu0 0.0
    %597 = vmatpush1.msra.mxu0 %v172
    %598 = vmatprep.subr.mxu0 0.0
    %599 = vmatpush1.msra.mxu0 0.0
    %600 = vmatprep.subr.mxu0 0.0
    %601 = vmatpush1.msra.mxu0 0.0
    %602 = vmatprep.subr.mxu0 0.0
    %603 = vmatpush1.msra.mxu0 0.0
    %604 = vmatprep.subr.mxu0 0.0
    %605 = vmatpush1.msra.mxu0 0.0
    %606 = vmatprep.subr.mxu0 0.0
    %607 = vmatpush1.msra.mxu0 0.0
    %608 = vmatprep.subr.mxu0 0.0
    %609 = vmatpush1.msra.mxu0 0.0
    %610 = vmatprep.subr.mxu0 0.0
    %611 = vmatpush1.msra.mxu0 0.0
    %612 = vmatprep.subr.mxu0 0.0
    %613 = vmatpush1.msra.mxu0 0.0
    %614 = vmatprep.subr.mxu0 0.0
    %615 = vmatpush1.msra.mxu0 0.0
    %616 = vmatprep.subr.mxu0 0.0
    %617 = vmatpush1.msra.mxu0 0.0
    %618 = vmatprep.subr.mxu0 0.0
    %619 = vmatpush1.msra.mxu0 0.0
    %620 = vmatprep.subr.mxu0 0.0
    %621 = vmatpush1.msra.mxu0 0.0
    %622 = vmatprep.subr.mxu0 0.0
    %623 = vmatpush1.msra.mxu0 0.0
    %624 = vmatprep.subr.mxu0 0.0
    %625 = vmatpush1.msra.mxu0 0.0
    %626 = vmatprep.subr.mxu0 0.0
    %627 = vmatpush1.msra.mxu0 0.0
    %628 = vmatprep.subr.mxu0 0.0
    %629 = vmatpush1.msra.mxu0 0.0
    %630 = vmatprep.subr.mxu0 0.0
    %631 = vmatpush1.msra.mxu0 0.0
    %632 = vmatprep.subr.mxu0 0.0
    %633 = vmatpush1.msra.mxu0 0.0
    %634 = vmatprep.subr.mxu0 0.0
    %635 = vmatpush1.msra.mxu0 0.0
    %636 = vmatprep.subr.mxu0 0.0
    %637 = vmatpush1.msra.mxu0 0.0
    %638 = vmatprep.subr.mxu0 0.0
    %639 = vmatpush1.msra.mxu0 0.0
    %640 = vmatprep.subr.mxu0 0.0
    %641 = vmatpush1.msra.mxu0 0.0
    %642 = vmatprep.subr.mxu0 0.0
    %643 = vmatpush1.msra.mxu0 0.0
    %644 = vmatprep.subr.mxu0 0.0
    %645 = vmatpush1.msra.mxu0 0.0
    %646 = vmatprep.subr.mxu0 0.0
    %647 = vmatpush1.msra.mxu0 0.0
    %648 = vmatprep.subr.mxu0 0.0
    %649 = vmatpush1.msra.mxu0 0.0
    %650 = vmatprep.subr.mxu0 0.0
    %651 = vmatpush1.msra.mxu0 0.0
    %652 = vmatprep.subr.mxu0 0.0
    %653 = vmatpush1.msra.mxu0 0.0
    %654 = vmatprep.mubr.f32.mxu0 0.0
    %655 = vmatmul.mubr.f32.gmra.mrb[0].mxu0 %v588
    %v656 = vpop.f32.mrb[0].mxu0
    %v657 = vadd.f32 0.0, %v656
    %v658 = vpop.f32.mrb[0].mxu0
    %659 = vdwg.mxu0
    %v660 = vadd.f32 %v166, %v657
    %v661 = vmul.f32 %v660, 0.5
    %v662 = vtanh.pop %v661
    %v663 = vmul.f32 %v662, 0.5
    %v664 = vadd.f32 %v663, 0.5
    %v665 = vtanh.pop %v660
    %v667 = vrot.slane %v577, 6
    %v669 = vmul.f32 %v664, %v667
    %671 = vrot.lane.b32.xlu0 %v665, 64
    %v672 = vpop.permute.xlu0 %671
    %v674 = vmul.f32 %v664, %v672
    %676 = vrot.lane.b32.xlu0 %v674, 32
    %v677 = vpop.permute.xlu0 %676
    %v679 = vadd.f32 %v669, %v677
    %v680 = vtanh.pop %v679
    %682 = vrot.lane.b32.xlu0 %v680, 64
    %v683 = vpop.permute.xlu0 %682
    %v685 = vmul.f32 %v664, %v683
    %687 = vrot.lane.b32.xlu0 %v685, 32
    %v688 = vpop.permute.xlu0 %687
    %v689 = vsel %vm173, %v688, 0
    %691 = vmatprep.subr.mxu0 0.0
    %692 = vmatpush1.msra.mxu0 %v169
    %693 = vmatprep.subr.mxu0 0.0
    %694 = vmatpush1.msra.mxu0 %v170
    %695 = vmatprep.subr.mxu0 0.0
    %696 = vmatpush1.msra.mxu0 %v171
    %697 = vmatprep.subr.mxu0 0.0
    %698 = vmatpush1.msra.mxu0 %v172
    %699 = vmatprep.subr.mxu0 0.0
    %700 = vmatpush1.msra.mxu0 0.0
    %701 = vmatprep.subr.mxu0 0.0
    %702 = vmatpush1.msra.mxu0 0.0
    %703 = vmatprep.subr.mxu0 0.0
    %704 = vmatpush1.msra.mxu0 0.0
    %705 = vmatprep.subr.mxu0 0.0
    %706 = vmatpush1.msra.mxu0 0.0
    %707 = vmatprep.subr.mxu0 0.0
    %708 = vmatpush1.msra.mxu0 0.0
    %709 = vmatprep.subr.mxu0 0.0
    %710 = vmatpush1.msra.mxu0 0.0
    %711 = vmatprep.subr.mxu0 0.0
    %712 = vmatpush1.msra.mxu0 0.0
    %713 = vmatprep.subr.mxu0 0.0
    %714 = vmatpush1.msra.mxu0 0.0
    %715 = vmatprep.subr.mxu0 0.0
    %716 = vmatpush1.msra.mxu0 0.0
    %717 = vmatprep.subr.mxu0 0.0
    %718 = vmatpush1.msra.mxu0 0.0
    %719 = vmatprep.subr.mxu0 0.0
    %720 = vmatpush1.msra.mxu0 0.0
    %721 = vmatprep.subr.mxu0 0.0
    %722 = vmatpush1.msra.mxu0 0.0
    %723 = vmatprep.subr.mxu0 0.0
    %724 = vmatpush1.msra.mxu0 0.0
    %725 = vmatprep.subr.mxu0 0.0
    %726 = vmatpush1.msra.mxu0 0.0
    %727 = vmatprep.subr.mxu0 0.0
    %728 = vmatpush1.msra.mxu0 0.0
    %729 = vmatprep.subr.mxu0 0.0
    %730 = vmatpush1.msra.mxu0 0.0
    %731 = vmatprep.subr.mxu0 0.0
    %732 = vmatpush1.msra.mxu0 0.0
    %733 = vmatprep.subr.mxu0 0.0
    %734 = vmatpush1.msra.mxu0 0.0
    %735 = vmatprep.subr.mxu0 0.0
    %736 = vmatpush1.msra.mxu0 0.0
    %737 = vmatprep.subr.mxu0 0.0
    %738 = vmatpush1.msra.mxu0 0.0
    %739 = vmatprep.subr.mxu0 0.0
    %740 = vmatpush1.msra.mxu0 0.0
    %741 = vmatprep.subr.mxu0 0.0
    %742 = vmatpush1.msra.mxu0 0.0
    %743 = vmatprep.subr.mxu0 0.0
    %744 = vmatpush1.msra.mxu0 0.0
    %745 = vmatprep.subr.mxu0 0.0
    %746 = vmatpush1.msra.mxu0 0.0
    %747 = vmatprep.subr.mxu0 0.0
    %748 = vmatpush1.msra.mxu0 0.0
    %749 = vmatprep.subr.mxu0 0.0
    %750 = vmatpush1.msra.mxu0 0.0
    %751 = vmatprep.subr.mxu0 0.0
    %752 = vmatpush1.msra.mxu0 0.0
    %753 = vmatprep.subr.mxu0 0.0
    %754 = vmatpush1.msra.mxu0 0.0
    %755 = vmatprep.mubr.f32.mxu0 0.0
    %756 = vmatmul.mubr.f32.gmra.mrb[0].mxu0 %v689
    %v757 = vpop.f32.mrb[0].mxu0
    %v758 = vadd.f32 0.0, %v757
    %v759 = vpop.f32.mrb[0].mxu0
    %760 = vdwg.mxu0
    %v762 = vrot.slane %v758, 6
    %v764 = vadd.f32 %v166, %v762
    %v765 = vmul.f32 %v764, 0.5
    %v766 = vtanh.pop %v765
    %v767 = vmul.f32 %v766, 0.5
    %v768 = vadd.f32 %v767, 0.5
    %v769 = vtanh.pop %v764
    %v771 = vrot.slane %v679, 6
    %v773 = vmul.f32 %v768, %v771
    %775 = vrot.lane.b32.xlu0 %v769, 64
    %v776 = vpop.permute.xlu0 %775
    %v778 = vmul.f32 %v768, %v776
    %780 = vrot.lane.b32.xlu0 %v778, 32
    %v781 = vpop.permute.xlu0 %780
    %v783 = vadd.f32 %v773, %v781
    %v784 = vtanh.pop %v783
    %786 = vrot.lane.b32.xlu0 %v784, 64
    %v787 = vpop.permute.xlu0 %786
    %v789 = vmul.f32 %v768, %v787
    %v791 = vrot.slane %v789, 2
    %792 = vrot.lane.b32.xlu0 %v791, 32
    %v793 = vpop.permute.xlu0 %792
    %v794 = vsel %vm173, %v793, 0
    %796 = vmatprep.subr.mxu0 0.0
    %797 = vmatpush1.msra.mxu0 %v169
    %798 = vmatprep.subr.mxu0 0.0
    %799 = vmatpush1.msra.mxu0 %v170
    %800 = vmatprep.subr.mxu0 0.0
    %801 = vmatpush1.msra.mxu0 %v171
    %802 = vmatprep.subr.mxu0 0.0
    %803 = vmatpush1.msra.mxu0 %v172
    %804 = vmatprep.subr.mxu0 0.0
    %805 = vmatpush1.msra.mxu0 0.0
    %806 = vmatprep.subr.mxu0 0.0
    %807 = vmatpush1.msra.mxu0 0.0
    %808 = vmatprep.subr.mxu0 0.0
    %809 = vmatpush1.msra.mxu0 0.0
    %810 = vmatprep.subr.mxu0 0.0
    %811 = vmatpush1.msra.mxu0 0.0
    %812 = vmatprep.subr.mxu0 0.0
    %813 = vmatpush1.msra.mxu0 0.0
    %814 = vmatprep.subr.mxu0 0.0
    %815 = vmatpush1.msra.mxu0 0.0
    %816 = vmatprep.subr.mxu0 0.0
    %817 = vmatpush1.msra.mxu0 0.0
    %818 = vmatprep.subr.mxu0 0.0
    %819 = vmatpush1.msra.mxu0 0.0
    %820 = vmatprep.subr.mxu0 0.0
    %821 = vmatpush1.msra.mxu0 0.0
    %822 = vmatprep.subr.mxu0 0.0
    %823 = vmatpush1.msra.mxu0 0.0
    %824 = vmatprep.subr.mxu0 0.0
    %825 = vmatpush1.msra.mxu0 0.0
    %826 = vmatprep.subr.mxu0 0.0
    %827 = vmatpush1.msra.mxu0 0.0
    %828 = vmatprep.subr.mxu0 0.0
    %829 = vmatpush1.msra.mxu0 0.0
    %830 = vmatprep.subr.mxu0 0.0
    %831 = vmatpush1.msra.mxu0 0.0
    %832 = vmatprep.subr.mxu0 0.0
    %833 = vmatpush1.msra.mxu0 0.0
    %834 = vmatprep.subr.mxu0 0.0
    %835 = vmatpush1.msra.mxu0 0.0
    %836 = vmatprep.subr.mxu0 0.0
    %837 = vmatpush1.msra.mxu0 0.0
    %838 = vmatprep.subr.mxu0 0.0
    %839 = vmatpush1.msra.mxu0 0.0
    %840 = vmatprep.subr.mxu0 0.0
    %841 = vmatpush1.msra.mxu0 0.0
    %842 = vmatprep.subr.mxu0 0.0
    %843 = vmatpush1.msra.mxu0 0.0
    %844 = vmatprep.subr.mxu0 0.0
    %845 = vmatpush1.msra.mxu0 0.0
    %846 = vmatprep.subr.mxu0 0.0
    %847 = vmatpush1.msra.mxu0 0.0
    %848 = vmatprep.subr.mxu0 0.0
    %849 = vmatpush1.msra.mxu0 0.0
    %850 = vmatprep.subr.mxu0 0.0
    %851 = vmatpush1.msra.mxu0 0.0
    %852 = vmatprep.subr.mxu0 0.0
    %853 = vmatpush1.msra.mxu0 0.0
    %854 = vmatprep.subr.mxu0 0.0
    %855 = vmatpush1.msra.mxu0 0.0
    %856 = vmatprep.subr.mxu0 0.0
    %857 = vmatpush1.msra.mxu0 0.0
    %858 = vmatprep.subr.mxu0 0.0
    %859 = vmatpush1.msra.mxu0 0.0
    %860 = vmatprep.mubr.f32.mxu0 0.0
    %861 = vmatmul.mubr.f32.gmra.mrb[0].mxu0 %v794
    %v862 = vpop.f32.mrb[0].mxu0
    %v863 = vadd.f32 0.0, %v862
    %v864 = vpop.f32.mrb[0].mxu0
    %865 = vdwg.mxu0
    %v867 = vrot.slane %v863, 4
    %v869 = vadd.f32 %v166, %v867
    %v870 = vmul.f32 %v869, 0.5
    %v871 = vtanh.pop %v870
    %v872 = vmul.f32 %v871, 0.5
    %v873 = vadd.f32 %v872, 0.5
    %v874 = vtanh.pop %v869
    %v876 = vrot.slane %v783, 6
    %v878 = vmul.f32 %v873, %v876
    %880 = vrot.lane.b32.xlu0 %v874, 64
    %v881 = vpop.permute.xlu0 %880
    %v883 = vmul.f32 %v873, %v881
    %885 = vrot.lane.b32.xlu0 %v883, 32
    %v886 = vpop.permute.xlu0 %885
    %v888 = vadd.f32 %v878, %v886
    %v889 = vtanh.pop %v888
    %891 = vrot.lane.b32.xlu0 %v889, 64
    %v892 = vpop.permute.xlu0 %891
    %v894 = vmul.f32 %v873, %v892
    %v896 = vrot.slane %v894, 4
    %897 = vrot.lane.b32.xlu0 %v896, 32
    %v898 = vpop.permute.xlu0 %897
    %v899 = vsel %vm173, %v898, 0
    %901 = vmatprep.subr.mxu0 0.0
    %902 = vmatpush1.msra.mxu0 %v169
    %903 = vmatprep.subr.mxu0 0.0
    %904 = vmatpush1.msra.mxu0 %v170
    %905 = vmatprep.subr.mxu0 0.0
    %906 = vmatpush1.msra.mxu0 %v171
    %907 = vmatprep.subr.mxu0 0.0
    %908 = vmatpush1.msra.mxu0 %v172
    %909 = vmatprep.subr.mxu0 0.0
    %910 = vmatpush1.msra.mxu0 0.0
    %911 = vmatprep.subr.mxu0 0.0
    %912 = vmatpush1.msra.mxu0 0.0
    %913 = vmatprep.subr.mxu0 0.0
    %914 = vmatpush1.msra.mxu0 0.0
    %915 = vmatprep.subr.mxu0 0.0
    %916 = vmatpush1.msra.mxu0 0.0
    %917 = vmatprep.subr.mxu0 0.0
    %918 = vmatpush1.msra.mxu0 0.0
    %919 = vmatprep.subr.mxu0 0.0
    %920 = vmatpush1.msra.mxu0 0.0
    %921 = vmatprep.subr.mxu0 0.0
    %922 = vmatpush1.msra.mxu0 0.0
    %923 = vmatprep.subr.mxu0 0.0
    %924 = vmatpush1.msra.mxu0 0.0
    %925 = vmatprep.subr.mxu0 0.0
    %926 = vmatpush1.msra.mxu0 0.0
    %927 = vmatprep.subr.mxu0 0.0
    %928 = vmatpush1.msra.mxu0 0.0
    %929 = vmatprep.subr.mxu0 0.0
    %930 = vmatpush1.msra.mxu0 0.0
    %931 = vmatprep.subr.mxu0 0.0
    %932 = vmatpush1.msra.mxu0 0.0
    %933 = vmatprep.subr.mxu0 0.0
    %934 = vmatpush1.msra.mxu0 0.0
    %935 = vmatprep.subr.mxu0 0.0
    %936 = vmatpush1.msra.mxu0 0.0
    %937 = vmatprep.subr.mxu0 0.0
    %938 = vmatpush1.msra.mxu0 0.0
    %939 = vmatprep.subr.mxu0 0.0
    %940 = vmatpush1.msra.mxu0 0.0
    %941 = vmatprep.subr.mxu0 0.0
    %942 = vmatpush1.msra.mxu0 0.0
    %943 = vmatprep.subr.mxu0 0.0
    %944 = vmatpush1.msra.mxu0 0.0
    %945 = vmatprep.subr.mxu0 0.0
    %946 = vmatpush1.msra.mxu0 0.0
    %947 = vmatprep.subr.mxu0 0.0
    %948 = vmatpush1.msra.mxu0 0.0
    %949 = vmatprep.subr.mxu0 0.0
    %950 = vmatpush1.msra.mxu0 0.0
    %951 = vmatprep.subr.mxu0 0.0
    %952 = vmatpush1.msra.mxu0 0.0
    %953 = vmatprep.subr.mxu0 0.0
    %954 = vmatpush1.msra.mxu0 0.0
    %955 = vmatprep.subr.mxu0 0.0
    %956 = vmatpush1.msra.mxu0 0.0
    %957 = vmatprep.subr.mxu0 0.0
    %958 = vmatpush1.msra.mxu0 0.0
    %959 = vmatprep.subr.mxu0 0.0
    %960 = vmatpush1.msra.mxu0 0.0
    %961 = vmatprep.subr.mxu0 0.0
    %962 = vmatpush1.msra.mxu0 0.0
    %963 = vmatprep.subr.mxu0 0.0
    %964 = vmatpush1.msra.mxu0 0.0
    %965 = vmatprep.mubr.f32.mxu0 0.0
    %966 = vmatmul.mubr.f32.gmra.mrb[0].mxu0 %v899
    %v967 = vpop.f32.mrb[0].mxu0
    %v968 = vadd.f32 0.0, %v967
    %v969 = vpop.f32.mrb[0].mxu0
    %970 = vdwg.mxu0
    %v972 = vrot.slane %v968, 2
    %v974 = vadd.f32 %v166, %v972
    %v975 = vmul.f32 %v974, 0.5
    %v976 = vtanh.pop %v975
    %v977 = vmul.f32 %v976, 0.5
    %v978 = vadd.f32 %v977, 0.5
    %v979 = vtanh.pop %v974
    %v981 = vrot.slane %v888, 6
    %v983 = vmul.f32 %v978, %v981
    %985 = vrot.lane.b32.xlu0 %v979, 64
    %v986 = vpop.permute.xlu0 %985
    %v988 = vmul.f32 %v978, %v986
    %990 = vrot.lane.b32.xlu0 %v988, 32
    %v991 = vpop.permute.xlu0 %990
    %v993 = vadd.f32 %v983, %v991
    %v994 = vtanh.pop %v993
    %996 = vrot.lane.b32.xlu0 %v994, 64
    %v997 = vpop.permute.xlu0 %996
    %v999 = vmul.f32 %v978, %v997
    %1001 = vrot.lane.b32.xlu0 %v999, 32
    %v1002 = vpop.permute.xlu0 %1001
    %v1004 = vsel %vm173, %v1002, %v993
    %vm1005 = vcmask 523270
    %1006 = vst.msk [vmem:[%s10 - $0x6] sm:$0xc0] %vm1005, %v1004
    %v1007 = vld [vmem:[%s5] sm:$0xff]
    %v1008 = vld [vmem:[%s5 + $0x8] sm:$0xff]
    %v1009 = vld [vmem:[%s5 + $0x10] sm:$0xff]
    %v1010 = vld [vmem:[%s5 + $0x18] sm:$0xff]
    %v1011 = vld [vmem:[%s4] sm:$0xff]
    %v1012 = vld [vmem:[%s4 + $0x8] sm:$0xff]
    %v1013 = vld [vmem:[%s4 + $0x10] sm:$0xff]
    %v1014 = vld [vmem:[%s4 + $0x18] sm:$0xff]
    %v1015 = vld [vmem:[%s6] sm:$0x1]
    %v1017 = vlaneseq
    %v1018 = vshrl.u32 %v1017, 7
    %v1019 = vsub.s32 0, %v1018
    %v1020 = vrot.slane %v1015, %v1019
    %1022 = vmatprep.subr.mxu0 0.0
    %1023 = vmatpush1.msra.mxu0 %v1011
    %1024 = vmatprep.subr.mxu0 0.0
    %1025 = vmatpush1.msra.mxu0 %v1012
    %1026 = vmatprep.subr.mxu0 0.0
    %1027 = vmatpush1.msra.mxu0 %v1013
    %1028 = vmatprep.subr.mxu0 0.0
    %1029 = vmatpush1.msra.mxu0 %v1014
    %1030 = vmatprep.subr.mxu0 0.0
    %1031 = vmatpush1.msra.mxu0 0.0
    %1032 = vmatprep.subr.mxu0 0.0
    %1033 = vmatpush1.msra.mxu0 0.0
    %1034 = vmatprep.subr.mxu0 0.0
    %1035 = vmatpush1.msra.mxu0 0.0
    %1036 = vmatprep.subr.mxu0 0.0
    %1037 = vmatpush1.msra.mxu0 0.0
    %1038 = vmatprep.subr.mxu0 0.0
    %1039 = vmatpush1.msra.mxu0 0.0
    %1040 = vmatprep.subr.mxu0 0.0
    %1041 = vmatpush1.msra.mxu0 0.0
    %1042 = vmatprep.subr.mxu0 0.0
    %1043 = vmatpush1.msra.mxu0 0.0
    %1044 = vmatprep.subr.mxu0 0.0
    %1045 = vmatpush1.msra.mxu0 0.0
    %1046 = vmatprep.subr.mxu0 0.0
    %1047 = vmatpush1.msra.mxu0 0.0
    %1048 = vmatprep.subr.mxu0 0.0
    %1049 = vmatpush1.msra.mxu0 0.0
    %1050 = vmatprep.subr.mxu0 0.0
    %1051 = vmatpush1.msra.mxu0 0.0
    %1052 = vmatprep.subr.mxu0 0.0
    %1053 = vmatpush1.msra.mxu0 0.0
    %1054 = vmatprep.subr.mxu0 0.0
    %1055 = vmatpush1.msra.mxu0 0.0
    %1056 = vmatprep.subr.mxu0 0.0
    %1057 = vmatpush1.msra.mxu0 0.0
    %1058 = vmatprep.subr.mxu0 0.0
    %1059 = vmatpush1.msra.mxu0 0.0
    %1060 = vmatprep.subr.mxu0 0.0
    %1061 = vmatpush1.msra.mxu0 0.0
    %1062 = vmatprep.subr.mxu0 0.0
    %1063 = vmatpush1.msra.mxu0 0.0
    %1064 = vmatprep.subr.mxu0 0.0
    %1065 = vmatpush1.msra.mxu0 0.0
    %1066 = vmatprep.subr.mxu0 0.0
    %1067 = vmatpush1.msra.mxu0 0.0
    %1068 = vmatprep.subr.mxu0 0.0
    %1069 = vmatpush1.msra.mxu0 0.0
    %1070 = vmatprep.subr.mxu0 0.0
    %1071 = vmatpush1.msra.mxu0 0.0
    %1072 = vmatprep.subr.mxu0 0.0
    %1073 = vmatpush1.msra.mxu0 0.0
    %1074 = vmatprep.subr.mxu0 0.0
    %1075 = vmatpush1.msra.mxu0 0.0
    %1076 = vmatprep.subr.mxu0 0.0
    %1077 = vmatpush1.msra.mxu0 0.0
    %1078 = vmatprep.subr.mxu0 0.0
    %1079 = vmatpush1.msra.mxu0 0.0
    %1080 = vmatprep.subr.mxu0 0.0
    %1081 = vmatpush1.msra.mxu0 0.0
    %1082 = vmatprep.subr.mxu0 0.0
    %1083 = vmatpush1.msra.mxu0 0.0
    %1084 = vmatprep.subr.mxu0 0.0
    %1085 = vmatpush1.msra.mxu0 0.0
    %1086 = vmatprep.mubr.f32.mxu0 0.0
    %1087 = vmatmul.mubr.f32.gmra.mrb[0].mxu0 %v273
    %v1088 = vpop.f32.mrb[0].mxu0
    %v1089 = vadd.f32 %v1020, %v1088
    %v1090 = vpop.f32.mrb[0].mxu0
    %1091 = vdwg.mxu0
    %1092 = vmatprep.subr.mxu0 0.0
    %1093 = vmatpush1.msra.mxu0 %v1011
    %1094 = vmatprep.subr.mxu0 0.0
    %1095 = vmatpush1.msra.mxu0 %v1012
    %1096 = vmatprep.subr.mxu0 0.0
    %1097 = vmatpush1.msra.mxu0 %v1013
    %1098 = vmatprep.subr.mxu0 0.0
    %1099 = vmatpush1.msra.mxu0 %v1014
    %1100 = vmatprep.subr.mxu0 0.0
    %1101 = vmatpush1.msra.mxu0 0.0
    %1102 = vmatprep.subr.mxu0 0.0
    %1103 = vmatpush1.msra.mxu0 0.0
    %1104 = vmatprep.subr.mxu0 0.0
    %1105 = vmatpush1.msra.mxu0 0.0
    %1106 = vmatprep.subr.mxu0 0.0
    %1107 = vmatpush1.msra.mxu0 0.0
    %1108 = vmatprep.subr.mxu0 0.0
    %1109 = vmatpush1.msra.mxu0 0.0
    %1110 = vmatprep.subr.mxu0 0.0
    %1111 = vmatpush1.msra.mxu0 0.0
    %1112 = vmatprep.subr.mxu0 0.0
    %1113 = vmatpush1.msra.mxu0 0.0
    %1114 = vmatprep.subr.mxu0 0.0
    %1115 = vmatpush1.msra.mxu0 0.0
    %1116 = vmatprep.subr.mxu0 0.0
    %1117 = vmatpush1.msra.mxu0 0.0
    %1118 = vmatprep.subr.mxu0 0.0
    %1119 = vmatpush1.msra.mxu0 0.0
    %1120 = vmatprep.subr.mxu0 0.0
    %1121 = vmatpush1.msra.mxu0 0.0
    %1122 = vmatprep.subr.mxu0 0.0
    %1123 = vmatpush1.msra.mxu0 0.0
    %1124 = vmatprep.subr.mxu0 0.0
    %1125 = vmatpush1.msra.mxu0 0.0
    %1126 = vmatprep.subr.mxu0 0.0
    %1127 = vmatpush1.msra.mxu0 0.0
    %1128 = vmatprep.subr.mxu0 0.0
    %1129 = vmatpush1.msra.mxu0 0.0
    %1130 = vmatprep.subr.mxu0 0.0
    %1131 = vmatpush1.msra.mxu0 0.0
    %1132 = vmatprep.subr.mxu0 0.0
    %1133 = vmatpush1.msra.mxu0 0.0
    %1134 = vmatprep.subr.mxu0 0.0
    %1135 = vmatpush1.msra.mxu0 0.0
    %1136 = vmatprep.subr.mxu0 0.0
    %1137 = vmatpush1.msra.mxu0 0.0
    %1138 = vmatprep.subr.mxu0 0.0
    %1139 = vmatpush1.msra.mxu0 0.0
    %1140 = vmatprep.subr.mxu0 0.0
    %1141 = vmatpush1.msra.mxu0 0.0
    %1142 = vmatprep.subr.mxu0 0.0
    %1143 = vmatpush1.msra.mxu0 0.0
    %1144 = vmatprep.subr.mxu0 0.0
    %1145 = vmatpush1.msra.mxu0 0.0
    %1146 = vmatprep.subr.mxu0 0.0
    %1147 = vmatpush1.msra.mxu0 0.0
    %1148 = vmatprep.subr.mxu0 0.0
    %1149 = vmatpush1.msra.mxu0 0.0
    %1150 = vmatprep.subr.mxu0 0.0
    %1151 = vmatpush1.msra.mxu0 0.0
    %1152 = vmatprep.subr.mxu0 0.0
    %1153 = vmatpush1.msra.mxu0 0.0
    %1154 = vmatprep.subr.mxu0 0.0
    %1155 = vmatpush1.msra.mxu0 0.0
    %1156 = vmatprep.mubr.f32.mxu0 0.0
    %1157 = vmatmul.mubr.f32.gmra.mrb[0].mxu0 %v378
    %v1158 = vpop.f32.mrb[0].mxu0
    %v1159 = vadd.f32 %v1020, %v1158
    %v1160 = vpop.f32.mrb[0].mxu0
    %1161 = vdwg.mxu0
    %1162 = vmatprep.subr.mxu0 0.0
    %1163 = vmatpush1.msra.mxu0 %v1011
    %1164 = vmatprep.subr.mxu0 0.0
    %1165 = vmatpush1.msra.mxu0 %v1012
    %1166 = vmatprep.subr.mxu0 0.0
    %1167 = vmatpush1.msra.mxu0 %v1013
    %1168 = vmatprep.subr.mxu0 0.0
    %1169 = vmatpush1.msra.mxu0 %v1014
    %1170 = vmatprep.subr.mxu0 0.0
    %1171 = vmatpush1.msra.mxu0 0.0
    %1172 = vmatprep.subr.mxu0 0.0
    %1173 = vmatpush1.msra.mxu0 0.0
    %1174 = vmatprep.subr.mxu0 0.0
    %1175 = vmatpush1.msra.mxu0 0.0
    %1176 = vmatprep.subr.mxu0 0.0
    %1177 = vmatpush1.msra.mxu0 0.0
    %1178 = vmatprep.subr.mxu0 0.0
    %1179 = vmatpush1.msra.mxu0 0.0
    %1180 = vmatprep.subr.mxu0 0.0
    %1181 = vmatpush1.msra.mxu0 0.0
    %1182 = vmatprep.subr.mxu0 0.0
    %1183 = vmatpush1.msra.mxu0 0.0
    %1184 = vmatprep.subr.mxu0 0.0
    %1185 = vmatpush1.msra.mxu0 0.0
    %1186 = vmatprep.subr.mxu0 0.0
    %1187 = vmatpush1.msra.mxu0 0.0
    %1188 = vmatprep.subr.mxu0 0.0
    %1189 = vmatpush1.msra.mxu0 0.0
    %1190 = vmatprep.subr.mxu0 0.0
    %1191 = vmatpush1.msra.mxu0 0.0
    %1192 = vmatprep.subr.mxu0 0.0
    %1193 = vmatpush1.msra.mxu0 0.0
    %1194 = vmatprep.subr.mxu0 0.0
    %1195 = vmatpush1.msra.mxu0 0.0
    %1196 = vmatprep.subr.mxu0 0.0
    %1197 = vmatpush1.msra.mxu0 0.0
    %1198 = vmatprep.subr.mxu0 0.0
    %1199 = vmatpush1.msra.mxu0 0.0
    %1200 = vmatprep.subr.mxu0 0.0
    %1201 = vmatpush1.msra.mxu0 0.0
    %1202 = vmatprep.subr.mxu0 0.0
    %1203 = vmatpush1.msra.mxu0 0.0
    %1204 = vmatprep.subr.mxu0 0.0
    %1205 = vmatpush1.msra.mxu0 0.0
    %1206 = vmatprep.subr.mxu0 0.0
    %1207 = vmatpush1.msra.mxu0 0.0
    %1208 = vmatprep.subr.mxu0 0.0
    %1209 = vmatpush1.msra.mxu0 0.0
    %1210 = vmatprep.subr.mxu0 0.0
    %1211 = vmatpush1.msra.mxu0 0.0
    %1212 = vmatprep.subr.mxu0 0.0
    %1213 = vmatpush1.msra.mxu0 0.0
    %1214 = vmatprep.subr.mxu0 0.0
    %1215 = vmatpush1.msra.mxu0 0.0
    %1216 = vmatprep.subr.mxu0 0.0
    %1217 = vmatpush1.msra.mxu0 0.0
    %1218 = vmatprep.subr.mxu0 0.0
    %1219 = vmatpush1.msra.mxu0 0.0
    %1220 = vmatprep.subr.mxu0 0.0
    %1221 = vmatpush1.msra.mxu0 0.0
    %1222 = vmatprep.subr.mxu0 0.0
    %1223 = vmatpush1.msra.mxu0 0.0
    %1224 = vmatprep.subr.mxu0 0.0
    %1225 = vmatpush1.msra.mxu0 0.0
    %1226 = vmatprep.mubr.f32.mxu0 0.0
    %1227 = vmatmul.mubr.f32.gmra.mrb[0].mxu0 %v483
    %v1228 = vpop.f32.mrb[0].mxu0
    %v1229 = vadd.f32 %v1020, %v1228
    %v1230 = vpop.f32.mrb[0].mxu0
    %1231 = vdwg.mxu0
    %1232 = vmatprep.subr.mxu0 0.0
    %1233 = vmatpush1.msra.mxu0 %v1011
    %1234 = vmatprep.subr.mxu0 0.0
    %1235 = vmatpush1.msra.mxu0 %v1012
    %1236 = vmatprep.subr.mxu0 0.0
    %1237 = vmatpush1.msra.mxu0 %v1013
    %1238 = vmatprep.subr.mxu0 0.0
    %1239 = vmatpush1.msra.mxu0 %v1014
    %1240 = vmatprep.subr.mxu0 0.0
    %1241 = vmatpush1.msra.mxu0 0.0
    %1242 = vmatprep.subr.mxu0 0.0
    %1243 = vmatpush1.msra.mxu0 0.0
    %1244 = vmatprep.subr.mxu0 0.0
    %1245 = vmatpush1.msra.mxu0 0.0
    %1246 = vmatprep.subr.mxu0 0.0
    %1247 = vmatpush1.msra.mxu0 0.0
    %1248 = vmatprep.subr.mxu0 0.0
    %1249 = vmatpush1.msra.mxu0 0.0
    %1250 = vmatprep.subr.mxu0 0.0
    %1251 = vmatpush1.msra.mxu0 0.0
    %1252 = vmatprep.subr.mxu0 0.0
    %1253 = vmatpush1.msra.mxu0 0.0
    %1254 = vmatprep.subr.mxu0 0.0
    %1255 = vmatpush1.msra.mxu0 0.0
    %1256 = vmatprep.subr.mxu0 0.0
    %1257 = vmatpush1.msra.mxu0 0.0
    %1258 = vmatprep.subr.mxu0 0.0
    %1259 = vmatpush1.msra.mxu0 0.0
    %1260 = vmatprep.subr.mxu0 0.0
    %1261 = vmatpush1.msra.mxu0 0.0
    %1262 = vmatprep.subr.mxu0 0.0
    %1263 = vmatpush1.msra.mxu0 0.0
    %1264 = vmatprep.subr.mxu0 0.0
    %1265 = vmatpush1.msra.mxu0 0.0
    %1266 = vmatprep.subr.mxu0 0.0
    %1267 = vmatpush1.msra.mxu0 0.0
    %1268 = vmatprep.subr.mxu0 0.0
    %1269 = vmatpush1.msra.mxu0 0.0
    %1270 = vmatprep.subr.mxu0 0.0
    %1271 = vmatpush1.msra.mxu0 0.0
    %1272 = vmatprep.subr.mxu0 0.0
    %1273 = vmatpush1.msra.mxu0 0.0
    %1274 = vmatprep.subr.mxu0 0.0
    %1275 = vmatpush1.msra.mxu0 0.0
    %1276 = vmatprep.subr.mxu0 0.0
    %1277 = vmatpush1.msra.mxu0 0.0
    %1278 = vmatprep.subr.mxu0 0.0
    %1279 = vmatpush1.msra.mxu0 0.0
    %1280 = vmatprep.subr.mxu0 0.0
    %1281 = vmatpush1.msra.mxu0 0.0
    %1282 = vmatprep.subr.mxu0 0.0
    %1283 = vmatpush1.msra.mxu0 0.0
    %1284 = vmatprep.subr.mxu0 0.0
    %1285 = vmatpush1.msra.mxu0 0.0
    %1286 = vmatprep.subr.mxu0 0.0
    %1287 = vmatpush1.msra.mxu0 0.0
    %1288 = vmatprep.subr.mxu0 0.0
    %1289 = vmatpush1.msra.mxu0 0.0
    %1290 = vmatprep.subr.mxu0 0.0
    %1291 = vmatpush1.msra.mxu0 0.0
    %1292 = vmatprep.subr.mxu0 0.0
    %1293 = vmatpush1.msra.mxu0 0.0
    %1294 = vmatprep.subr.mxu0 0.0
    %1295 = vmatpush1.msra.mxu0 0.0
    %1296 = vmatprep.mubr.f32.mxu0 0.0
    %1297 = vmatmul.mubr.f32.gmra.mrb[0].mxu0 %v588
    %v1298 = vpop.f32.mrb[0].mxu0
    %v1299 = vadd.f32 %v1020, %v1298
    %v1300 = vpop.f32.mrb[0].mxu0
    %1301 = vdwg.mxu0
    %1302 = vmatprep.subr.mxu0 0.0
    %1303 = vmatpush1.msra.mxu0 %v1011
    %1304 = vmatprep.subr.mxu0 0.0
    %1305 = vmatpush1.msra.mxu0 %v1012
    %1306 = vmatprep.subr.mxu0 0.0
    %1307 = vmatpush1.msra.mxu0 %v1013
    %1308 = vmatprep.subr.mxu0 0.0
    %1309 = vmatpush1.msra.mxu0 %v1014
    %1310 = vmatprep.subr.mxu0 0.0
    %1311 = vmatpush1.msra.mxu0 0.0
    %1312 = vmatprep.subr.mxu0 0.0
    %1313 = vmatpush1.msra.mxu0 0.0
    %1314 = vmatprep.subr.mxu0 0.0
    %1315 = vmatpush1.msra.mxu0 0.0
    %1316 = vmatprep.subr.mxu0 0.0
    %1317 = vmatpush1.msra.mxu0 0.0
    %1318 = vmatprep.subr.mxu0 0.0
    %1319 = vmatpush1.msra.mxu0 0.0
    %1320 = vmatprep.subr.mxu0 0.0
    %1321 = vmatpush1.msra.mxu0 0.0
    %1322 = vmatprep.subr.mxu0 0.0
    %1323 = vmatpush1.msra.mxu0 0.0
    %1324 = vmatprep.subr.mxu0 0.0
    %1325 = vmatpush1.msra.mxu0 0.0
    %1326 = vmatprep.subr.mxu0 0.0
    %1327 = vmatpush1.msra.mxu0 0.0
    %1328 = vmatprep.subr.mxu0 0.0
    %1329 = vmatpush1.msra.mxu0 0.0
    %1330 = vmatprep.subr.mxu0 0.0
    %1331 = vmatpush1.msra.mxu0 0.0
    %1332 = vmatprep.subr.mxu0 0.0
    %1333 = vmatpush1.msra.mxu0 0.0
    %1334 = vmatprep.subr.mxu0 0.0
    %1335 = vmatpush1.msra.mxu0 0.0
    %1336 = vmatprep.subr.mxu0 0.0
    %1337 = vmatpush1.msra.mxu0 0.0
    %1338 = vmatprep.subr.mxu0 0.0
    %1339 = vmatpush1.msra.mxu0 0.0
    %1340 = vmatprep.subr.mxu0 0.0
    %1341 = vmatpush1.msra.mxu0 0.0
    %1342 = vmatprep.subr.mxu0 0.0
    %1343 = vmatpush1.msra.mxu0 0.0
    %1344 = vmatprep.subr.mxu0 0.0
    %1345 = vmatpush1.msra.mxu0 0.0
    %1346 = vmatprep.subr.mxu0 0.0
    %1347 = vmatpush1.msra.mxu0 0.0
    %1348 = vmatprep.subr.mxu0 0.0
    %1349 = vmatpush1.msra.mxu0 0.0
    %1350 = vmatprep.subr.mxu0 0.0
    %1351 = vmatpush1.msra.mxu0 0.0
    %1352 = vmatprep.subr.mxu0 0.0
    %1353 = vmatpush1.msra.mxu0 0.0
    %1354 = vmatprep.subr.mxu0 0.0
    %1355 = vmatpush1.msra.mxu0 0.0
    %1356 = vmatprep.subr.mxu0 0.0
    %1357 = vmatpush1.msra.mxu0 0.0
    %1358 = vmatprep.subr.mxu0 0.0
    %1359 = vmatpush1.msra.mxu0 0.0
    %1360 = vmatprep.subr.mxu0 0.0
    %1361 = vmatpush1.msra.mxu0 0.0
    %1362 = vmatprep.subr.mxu0 0.0
    %1363 = vmatpush1.msra.mxu0 0.0
    %1364 = vmatprep.subr.mxu0 0.0
    %1365 = vmatpush1.msra.mxu0 0.0
    %1366 = vmatprep.mubr.f32.mxu0 0.0
    %1367 = vmatmul.mubr.f32.gmra.mrb[0].mxu0 %v689
    %v1368 = vpop.f32.mrb[0].mxu0
    %v1369 = vadd.f32 %v1020, %v1368
    %v1370 = vpop.f32.mrb[0].mxu0
    %1371 = vdwg.mxu0
    %1372 = vmatprep.subr.mxu0 0.0
    %1373 = vmatpush1.msra.mxu0 %v1011
    %1374 = vmatprep.subr.mxu0 0.0
    %1375 = vmatpush1.msra.mxu0 %v1012
    %1376 = vmatprep.subr.mxu0 0.0
    %1377 = vmatpush1.msra.mxu0 %v1013
    %1378 = vmatprep.subr.mxu0 0.0
    %1379 = vmatpush1.msra.mxu0 %v1014
    %1380 = vmatprep.subr.mxu0 0.0
    %1381 = vmatpush1.msra.mxu0 0.0
    %1382 = vmatprep.subr.mxu0 0.0
    %1383 = vmatpush1.msra.mxu0 0.0
    %1384 = vmatprep.subr.mxu0 0.0
    %1385 = vmatpush1.msra.mxu0 0.0
    %1386 = vmatprep.subr.mxu0 0.0
    %1387 = vmatpush1.msra.mxu0 0.0
    %1388 = vmatprep.subr.mxu0 0.0
    %1389 = vmatpush1.msra.mxu0 0.0
    %1390 = vmatprep.subr.mxu0 0.0
    %1391 = vmatpush1.msra.mxu0 0.0
    %1392 = vmatprep.subr.mxu0 0.0
    %1393 = vmatpush1.msra.mxu0 0.0
    %1394 = vmatprep.subr.mxu0 0.0
    %1395 = vmatpush1.msra.mxu0 0.0
    %1396 = vmatprep.subr.mxu0 0.0
    %1397 = vmatpush1.msra.mxu0 0.0
    %1398 = vmatprep.subr.mxu0 0.0
    %1399 = vmatpush1.msra.mxu0 0.0
    %1400 = vmatprep.subr.mxu0 0.0
    %1401 = vmatpush1.msra.mxu0 0.0
    %1402 = vmatprep.subr.mxu0 0.0
    %1403 = vmatpush1.msra.mxu0 0.0
    %1404 = vmatprep.subr.mxu0 0.0
    %1405 = vmatpush1.msra.mxu0 0.0
    %1406 = vmatprep.subr.mxu0 0.0
    %1407 = vmatpush1.msra.mxu0 0.0
    %1408 = vmatprep.subr.mxu0 0.0
    %1409 = vmatpush1.msra.mxu0 0.0
    %1410 = vmatprep.subr.mxu0 0.0
    %1411 = vmatpush1.msra.mxu0 0.0
    %1412 = vmatprep.subr.mxu0 0.0
    %1413 = vmatpush1.msra.mxu0 0.0
    %1414 = vmatprep.subr.mxu0 0.0
    %1415 = vmatpush1.msra.mxu0 0.0
    %1416 = vmatprep.subr.mxu0 0.0
    %1417 = vmatpush1.msra.mxu0 0.0
    %1418 = vmatprep.subr.mxu0 0.0
    %1419 = vmatpush1.msra.mxu0 0.0
    %1420 = vmatprep.subr.mxu0 0.0
    %1421 = vmatpush1.msra.mxu0 0.0
    %1422 = vmatprep.subr.mxu0 0.0
    %1423 = vmatpush1.msra.mxu0 0.0
    %1424 = vmatprep.subr.mxu0 0.0
    %1425 = vmatpush1.msra.mxu0 0.0
    %1426 = vmatprep.subr.mxu0 0.0
    %1427 = vmatpush1.msra.mxu0 0.0
    %1428 = vmatprep.subr.mxu0 0.0
    %1429 = vmatpush1.msra.mxu0 0.0
    %1430 = vmatprep.subr.mxu0 0.0
    %1431 = vmatpush1.msra.mxu0 0.0
    %1432 = vmatprep.subr.mxu0 0.0
    %1433 = vmatpush1.msra.mxu0 0.0
    %1434 = vmatprep.subr.mxu0 0.0
    %1435 = vmatpush1.msra.mxu0 0.0
    %1436 = vmatprep.mubr.f32.mxu0 0.0
    %1437 = vmatmul.mubr.f32.gmra.mrb[0].mxu0 %v794
    %v1438 = vpop.f32.mrb[0].mxu0
    %v1439 = vadd.f32 %v1020, %v1438
    %v1440 = vpop.f32.mrb[0].mxu0
    %1441 = vdwg.mxu0
    %1442 = vmatprep.subr.mxu0 0.0
    %1443 = vmatpush1.msra.mxu0 %v1011
    %1444 = vmatprep.subr.mxu0 0.0
    %1445 = vmatpush1.msra.mxu0 %v1012
    %1446 = vmatprep.subr.mxu0 0.0
    %1447 = vmatpush1.msra.mxu0 %v1013
    %1448 = vmatprep.subr.mxu0 0.0
    %1449 = vmatpush1.msra.mxu0 %v1014
    %1450 = vmatprep.subr.mxu0 0.0
    %1451 = vmatpush1.msra.mxu0 0.0
    %1452 = vmatprep.subr.mxu0 0.0
    %1453 = vmatpush1.msra.mxu0 0.0
    %1454 = vmatprep.subr.mxu0 0.0
    %1455 = vmatpush1.msra.mxu0 0.0
    %1456 = vmatprep.subr.mxu0 0.0
    %1457 = vmatpush1.msra.mxu0 0.0
    %1458 = vmatprep.subr.mxu0 0.0
    %1459 = vmatpush1.msra.mxu0 0.0
    %1460 = vmatprep.subr.mxu0 0.0
    %1461 = vmatpush1.msra.mxu0 0.0
    %1462 = vmatprep.subr.mxu0 0.0
    %1463 = vmatpush1.msra.mxu0 0.0
    %1464 = vmatprep.subr.mxu0 0.0
    %1465 = vmatpush1.msra.mxu0 0.0
    %1466 = vmatprep.subr.mxu0 0.0
    %1467 = vmatpush1.msra.mxu0 0.0
    %1468 = vmatprep.subr.mxu0 0.0
    %1469 = vmatpush1.msra.mxu0 0.0
    %1470 = vmatprep.subr.mxu0 0.0
    %1471 = vmatpush1.msra.mxu0 0.0
    %1472 = vmatprep.subr.mxu0 0.0
    %1473 = vmatpush1.msra.mxu0 0.0
    %1474 = vmatprep.subr.mxu0 0.0
    %1475 = vmatpush1.msra.mxu0 0.0
    %1476 = vmatprep.subr.mxu0 0.0
    %1477 = vmatpush1.msra.mxu0 0.0
    %1478 = vmatprep.subr.mxu0 0.0
    %1479 = vmatpush1.msra.mxu0 0.0
    %1480 = vmatprep.subr.mxu0 0.0
    %1481 = vmatpush1.msra.mxu0 0.0
    %1482 = vmatprep.subr.mxu0 0.0
    %1483 = vmatpush1.msra.mxu0 0.0
    %1484 = vmatprep.subr.mxu0 0.0
    %1485 = vmatpush1.msra.mxu0 0.0
    %1486 = vmatprep.subr.mxu0 0.0
    %1487 = vmatpush1.msra.mxu0 0.0
    %1488 = vmatprep.subr.mxu0 0.0
    %1489 = vmatpush1.msra.mxu0 0.0
    %1490 = vmatprep.subr.mxu0 0.0
    %1491 = vmatpush1.msra.mxu0 0.0
    %1492 = vmatprep.subr.mxu0 0.0
    %1493 = vmatpush1.msra.mxu0 0.0
    %1494 = vmatprep.subr.mxu0 0.0
    %1495 = vmatpush1.msra.mxu0 0.0
    %1496 = vmatprep.subr.mxu0 0.0
    %1497 = vmatpush1.msra.mxu0 0.0
    %1498 = vmatprep.subr.mxu0 0.0
    %1499 = vmatpush1.msra.mxu0 0.0
    %1500 = vmatprep.subr.mxu0 0.0
    %1501 = vmatpush1.msra.mxu0 0.0
    %1502 = vmatprep.subr.mxu0 0.0
    %1503 = vmatpush1.msra.mxu0 0.0
    %1504 = vmatprep.subr.mxu0 0.0
    %1505 = vmatpush1.msra.mxu0 0.0
    %1506 = vmatprep.mubr.f32.mxu0 0.0
    %1507 = vmatmul.mubr.f32.gmra.mrb[0].mxu0 %v899
    %v1508 = vpop.f32.mrb[0].mxu0
    %v1509 = vadd.f32 %v1020, %v1508
    %v1510 = vpop.f32.mrb[0].mxu0
    %1511 = vdwg.mxu0
    %v1512 = vrot.slane %v999, 6
    %1513 = vrot.lane.b32.xlu0 %v1512, 32
    %v1514 = vpop.permute.xlu0 %1513
    %v1515 = vsel %vm173, %v1514, 0
    %1517 = vmatprep.subr.mxu0 0.0
    %1518 = vmatpush1.msra.mxu0 %v1011
    %1519 = vmatprep.subr.mxu0 0.0
    %1520 = vmatpush1.msra.mxu0 %v1012
    %1521 = vmatprep.subr.mxu0 0.0
    %1522 = vmatpush1.msra.mxu0 %v1013
    %1523 = vmatprep.subr.mxu0 0.0
    %1524 = vmatpush1.msra.mxu0 %v1014
    %1525 = vmatprep.subr.mxu0 0.0
    %1526 = vmatpush1.msra.mxu0 0.0
    %1527 = vmatprep.subr.mxu0 0.0
    %1528 = vmatpush1.msra.mxu0 0.0
    %1529 = vmatprep.subr.mxu0 0.0
    %1530 = vmatpush1.msra.mxu0 0.0
    %1531 = vmatprep.subr.mxu0 0.0
    %1532 = vmatpush1.msra.mxu0 0.0
    %1533 = vmatprep.subr.mxu0 0.0
    %1534 = vmatpush1.msra.mxu0 0.0
    %1535 = vmatprep.subr.mxu0 0.0
    %1536 = vmatpush1.msra.mxu0 0.0
    %1537 = vmatprep.subr.mxu0 0.0
    %1538 = vmatpush1.msra.mxu0 0.0
    %1539 = vmatprep.subr.mxu0 0.0
    %1540 = vmatpush1.msra.mxu0 0.0
    %1541 = vmatprep.subr.mxu0 0.0
    %1542 = vmatpush1.msra.mxu0 0.0
    %1543 = vmatprep.subr.mxu0 0.0
    %1544 = vmatpush1.msra.mxu0 0.0
    %1545 = vmatprep.subr.mxu0 0.0
    %1546 = vmatpush1.msra.mxu0 0.0
    %1547 = vmatprep.subr.mxu0 0.0
    %1548 = vmatpush1.msra.mxu0 0.0
    %1549 = vmatprep.subr.mxu0 0.0
    %1550 = vmatpush1.msra.mxu0 0.0
    %1551 = vmatprep.subr.mxu0 0.0
    %1552 = vmatpush1.msra.mxu0 0.0
    %1553 = vmatprep.subr.mxu0 0.0
    %1554 = vmatpush1.msra.mxu0 0.0
    %1555 = vmatprep.subr.mxu0 0.0
    %1556 = vmatpush1.msra.mxu0 0.0
    %1557 = vmatprep.subr.mxu0 0.0
    %1558 = vmatpush1.msra.mxu0 0.0
    %1559 = vmatprep.subr.mxu0 0.0
    %1560 = vmatpush1.msra.mxu0 0.0
    %1561 = vmatprep.subr.mxu0 0.0
    %1562 = vmatpush1.msra.mxu0 0.0
    %1563 = vmatprep.subr.mxu0 0.0
    %1564 = vmatpush1.msra.mxu0 0.0
    %1565 = vmatprep.subr.mxu0 0.0
    %1566 = vmatpush1.msra.mxu0 0.0
    %1567 = vmatprep.subr.mxu0 0.0
    %1568 = vmatpush1.msra.mxu0 0.0
    %1569 = vmatprep.subr.mxu0 0.0
    %1570 = vmatpush1.msra.mxu0 0.0
    %1571 = vmatprep.subr.mxu0 0.0
    %1572 = vmatpush1.msra.mxu0 0.0
    %1573 = vmatprep.subr.mxu0 0.0
    %1574 = vmatpush1.msra.mxu0 0.0
    %1575 = vmatprep.subr.mxu0 0.0
    %1576 = vmatpush1.msra.mxu0 0.0
    %1577 = vmatprep.subr.mxu0 0.0
    %1578 = vmatpush1.msra.mxu0 0.0
    %1579 = vmatprep.subr.mxu0 0.0
    %1580 = vmatpush1.msra.mxu0 0.0
    %1581 = vmatprep.mubr.f32.mxu0 0.0
    %1582 = vmatmul.mubr.f32.gmra.mrb[0].mxu0 %v1515
    %v1583 = vpop.f32.mrb[0].mxu0
    %v1584 = vadd.f32 %v1020, %v1583
    %v1585 = vpop.f32.mrb[0].mxu0
    %1586 = vdwg.mxu0
    %1587 = vmatprep.subr.mxu0 0.0
    %1588 = vmatpush1.msra.mxu0 %v1007
    %1589 = vmatprep.subr.mxu0 0.0
    %1590 = vmatpush1.msra.mxu0 %v1008
    %1591 = vmatprep.subr.mxu0 0.0
    %1592 = vmatpush1.msra.mxu0 %v1009
    %1593 = vmatprep.subr.mxu0 0.0
    %1594 = vmatpush1.msra.mxu0 %v1010
    %1595 = vmatprep.subr.mxu0 0.0
    %1596 = vmatpush1.msra.mxu0 0.0
    %1597 = vmatprep.subr.mxu0 0.0
    %1598 = vmatpush1.msra.mxu0 0.0
    %1599 = vmatprep.subr.mxu0 0.0
    %1600 = vmatpush1.msra.mxu0 0.0
    %1601 = vmatprep.subr.mxu0 0.0
    %1602 = vmatpush1.msra.mxu0 0.0
    %1603 = vmatprep.subr.mxu0 0.0
    %1604 = vmatpush1.msra.mxu0 0.0
    %1605 = vmatprep.subr.mxu0 0.0
    %1606 = vmatpush1.msra.mxu0 0.0
    %1607 = vmatprep.subr.mxu0 0.0
    %1608 = vmatpush1.msra.mxu0 0.0
    %1609 = vmatprep.subr.mxu0 0.0
    %1610 = vmatpush1.msra.mxu0 0.0
    %1611 = vmatprep.subr.mxu0 0.0
    %1612 = vmatpush1.msra.mxu0 0.0
    %1613 = vmatprep.subr.mxu0 0.0
    %1614 = vmatpush1.msra.mxu0 0.0
    %1615 = vmatprep.subr.mxu0 0.0
    %1616 = vmatpush1.msra.mxu0 0.0
    %1617 = vmatprep.subr.mxu0 0.0
    %1618 = vmatpush1.msra.mxu0 0.0
    %1619 = vmatprep.subr.mxu0 0.0
    %1620 = vmatpush1.msra.mxu0 0.0
    %1621 = vmatprep.subr.mxu0 0.0
    %1622 = vmatpush1.msra.mxu0 0.0
    %1623 = vmatprep.subr.mxu0 0.0
    %1624 = vmatpush1.msra.mxu0 0.0
    %1625 = vmatprep.subr.mxu0 0.0
    %1626 = vmatpush1.msra.mxu0 0.0
    %1627 = vmatprep.subr.mxu0 0.0
    %1628 = vmatpush1.msra.mxu0 0.0
    %1629 = vmatprep.subr.mxu0 0.0
    %1630 = vmatpush1.msra.mxu0 0.0
    %1631 = vmatprep.subr.mxu0 0.0
    %1632 = vmatpush1.msra.mxu0 0.0
    %1633 = vmatprep.subr.mxu0 0.0
    %1634 = vmatpush1.msra.mxu0 0.0
    %1635 = vmatprep.subr.mxu0 0.0
    %1636 = vmatpush1.msra.mxu0 0.0
    %1637 = vmatprep.subr.mxu0 0.0
    %1638 = vmatpush1.msra.mxu0 0.0
    %1639 = vmatprep.subr.mxu0 0.0
    %1640 = vmatpush1.msra.mxu0 0.0
    %1641 = vmatprep.subr.mxu0 0.0
    %1642 = vmatpush1.msra.mxu0 0.0
    %1643 = vmatprep.subr.mxu0 0.0
    %1644 = vmatpush1.msra.mxu0 0.0
    %1645 = vmatprep.subr.mxu0 0.0
    %1646 = vmatpush1.msra.mxu0 0.0
    %1647 = vmatprep.subr.mxu0 0.0
    %1648 = vmatpush1.msra.mxu0 0.0
    %1649 = vmatprep.subr.mxu0 0.0
    %1650 = vmatpush1.msra.mxu0 0.0
    %1651 = vmatprep.mubr.f32.mxu0 0.0
    %1652 = vmatmul.mubr.f32.gmra.mrb[0].mxu0 %v175
    %v1653 = vpop.f32.mrb[0].mxu0
    %v1654 = vadd.f32 0.0, %v1653
    %v1655 = vpop.f32.mrb[0].mxu0
    %1656 = vdwg.mxu0
    %v1657 = vadd.f32 %v1089, %v1654
    %v1658 = vmul.f32 %v1657, 0.5
    %v1659 = vtanh.pop %v1658
    %v1660 = vmul.f32 %v1659, 0.5
    %v1661 = vadd.f32 %v1660, 0.5
    %v1662 = vtanh.pop %v1657
    %v1663 = vmul.f32 %v1661, 0.0
    %1665 = vrot.lane.b32.xlu0 %v1662, 64
    %v1666 = vpop.permute.xlu0 %1665
    %v1668 = vmul.f32 %v1661, %v1666
    %1670 = vrot.lane.b32.xlu0 %v1668, 32
    %v1671 = vpop.permute.xlu0 %1670
    %v1673 = vadd.f32 %v1663, %v1671
    %v1674 = vtanh.pop %v1673
    %1676 = vrot.lane.b32.xlu0 %v1674, 64
    %v1677 = vpop.permute.xlu0 %1676
    %v1679 = vmul.f32 %v1661, %v1677
    %1681 = vrot.lane.b32.xlu0 %v1679, 32
    %v1682 = vpop.permute.xlu0 %1681
    %v1683 = vsel %vm173, %v1682, 0
    %1685 = vmatprep.subr.mxu0 0.0
    %1686 = vmatpush1.msra.mxu0 %v1007
    %1687 = vmatprep.subr.mxu0 0.0
    %1688 = vmatpush1.msra.mxu0 %v1008
    %1689 = vmatprep.subr.mxu0 0.0
    %1690 = vmatpush1.msra.mxu0 %v1009
    %1691 = vmatprep.subr.mxu0 0.0
    %1692 = vmatpush1.msra.mxu0 %v1010
    %1693 = vmatprep.subr.mxu0 0.0
    %1694 = vmatpush1.msra.mxu0 0.0
    %1695 = vmatprep.subr.mxu0 0.0
    %1696 = vmatpush1.msra.mxu0 0.0
    %1697 = vmatprep.subr.mxu0 0.0
    %1698 = vmatpush1.msra.mxu0 0.0
    %1699 = vmatprep.subr.mxu0 0.0
    %1700 = vmatpush1.msra.mxu0 0.0
    %1701 = vmatprep.subr.mxu0 0.0
    %1702 = vmatpush1.msra.mxu0 0.0
    %1703 = vmatprep.subr.mxu0 0.0
    %1704 = vmatpush1.msra.mxu0 0.0
    %1705 = vmatprep.subr.mxu0 0.0
    %1706 = vmatpush1.msra.mxu0 0.0
    %1707 = vmatprep.subr.mxu0 0.0
    %1708 = vmatpush1.msra.mxu0 0.0
    %1709 = vmatprep.subr.mxu0 0.0
    %1710 = vmatpush1.msra.mxu0 0.0
    %1711 = vmatprep.subr.mxu0 0.0
    %1712 = vmatpush1.msra.mxu0 0.0
    %1713 = vmatprep.subr.mxu0 0.0
    %1714 = vmatpush1.msra.mxu0 0.0
    %1715 = vmatprep.subr.mxu0 0.0
    %1716 = vmatpush1.msra.mxu0 0.0
    %1717 = vmatprep.subr.mxu0 0.0
    %1718 = vmatpush1.msra.mxu0 0.0
    %1719 = vmatprep.subr.mxu0 0.0
    %1720 = vmatpush1.msra.mxu0 0.0
    %1721 = vmatprep.subr.mxu0 0.0
    %1722 = vmatpush1.msra.mxu0 0.0
    %1723 = vmatprep.subr.mxu0 0.0
    %1724 = vmatpush1.msra.mxu0 0.0
    %1725 = vmatprep.subr.mxu0 0.0
    %1726 = vmatpush1.msra.mxu0 0.0
    %1727 = vmatprep.subr.mxu0 0.0
    %1728 = vmatpush1.msra.mxu0 0.0
    %1729 = vmatprep.subr.mxu0 0.0
    %1730 = vmatpush1.msra.mxu0 0.0
    %1731 = vmatprep.subr.mxu0 0.0
    %1732 = vmatpush1.msra.mxu0 0.0
    %1733 = vmatprep.subr.mxu0 0.0
    %1734 = vmatpush1.msra.mxu0 0.0
    %1735 = vmatprep.subr.mxu0 0.0
    %1736 = vmatpush1.msra.mxu0 0.0
    %1737 = vmatprep.subr.mxu0 0.0
    %1738 = vmatpush1.msra.mxu0 0.0
    %1739 = vmatprep.subr.mxu0 0.0
    %1740 = vmatpush1.msra.mxu0 0.0
    %1741 = vmatprep.subr.mxu0 0.0
    %1742 = vmatpush1.msra.mxu0 0.0
    %1743 = vmatprep.subr.mxu0 0.0
    %1744 = vmatpush1.msra.mxu0 0.0
    %1745 = vmatprep.subr.mxu0 0.0
    %1746 = vmatpush1.msra.mxu0 0.0
    %1747 = vmatprep.subr.mxu0 0.0
    %1748 = vmatpush1.msra.mxu0 0.0
    %1749 = vmatprep.mubr.f32.mxu0 0.0
    %1750 = vmatmul.mubr.f32.gmra.mrb[0].mxu0 %v1683
    %v1751 = vpop.f32.mrb[0].mxu0
    %v1752 = vadd.f32 0.0, %v1751
    %v1753 = vpop.f32.mrb[0].mxu0
    %1754 = vdwg.mxu0
    %v1755 = vadd.f32 %v1159, %v1752
    %v1756 = vmul.f32 %v1755, 0.5
    %v1757 = vtanh.pop %v1756
    %v1758 = vmul.f32 %v1757, 0.5
    %v1759 = vadd.f32 %v1758, 0.5
    %v1760 = vtanh.pop %v1755
    %v1761 = vmul.f32 %v1759, %v1673
    %1763 = vrot.lane.b32.xlu0 %v1760, 64
    %v1764 = vpop.permute.xlu0 %1763
    %v1766 = vmul.f32 %v1759, %v1764
    %1768 = vrot.lane.b32.xlu0 %v1766, 32
    %v1769 = vpop.permute.xlu0 %1768
    %v1771 = vadd.f32 %v1761, %v1769
    %v1772 = vtanh.pop %v1771
    %1774 = vrot.lane.b32.xlu0 %v1772, 64
    %v1775 = vpop.permute.xlu0 %1774
    %v1777 = vmul.f32 %v1759, %v1775
    %1779 = vrot.lane.b32.xlu0 %v1777, 32
    %v1780 = vpop.permute.xlu0 %1779
    %v1781 = vsel %vm173, %v1780, 0
    %1783 = vmatprep.subr.mxu0 0.0
    %1784 = vmatpush1.msra.mxu0 %v1007
    %1785 = vmatprep.subr.mxu0 0.0
    %1786 = vmatpush1.msra.mxu0 %v1008
    %1787 = vmatprep.subr.mxu0 0.0
    %1788 = vmatpush1.msra.mxu0 %v1009
    %1789 = vmatprep.subr.mxu0 0.0
    %1790 = vmatpush1.msra.mxu0 %v1010
    %1791 = vmatprep.subr.mxu0 0.0
    %1792 = vmatpush1.msra.mxu0 0.0
    %1793 = vmatprep.subr.mxu0 0.0
    %1794 = vmatpush1.msra.mxu0 0.0
    %1795 = vmatprep.subr.mxu0 0.0
    %1796 = vmatpush1.msra.mxu0 0.0
    %1797 = vmatprep.subr.mxu0 0.0
    %1798 = vmatpush1.msra.mxu0 0.0
    %1799 = vmatprep.subr.mxu0 0.0
    %1800 = vmatpush1.msra.mxu0 0.0
    %1801 = vmatprep.subr.mxu0 0.0
    %1802 = vmatpush1.msra.mxu0 0.0
    %1803 = vmatprep.subr.mxu0 0.0
    %1804 = vmatpush1.msra.mxu0 0.0
    %1805 = vmatprep.subr.mxu0 0.0
    %1806 = vmatpush1.msra.mxu0 0.0
    %1807 = vmatprep.subr.mxu0 0.0
    %1808 = vmatpush1.msra.mxu0 0.0
    %1809 = vmatprep.subr.mxu0 0.0
    %1810 = vmatpush1.msra.mxu0 0.0
    %1811 = vmatprep.subr.mxu0 0.0
    %1812 = vmatpush1.msra.mxu0 0.0
    %1813 = vmatprep.subr.mxu0 0.0
    %1814 = vmatpush1.msra.mxu0 0.0
    %1815 = vmatprep.subr.mxu0 0.0
    %1816 = vmatpush1.msra.mxu0 0.0
    %1817 = vmatprep.subr.mxu0 0.0
    %1818 = vmatpush1.msra.mxu0 0.0
    %1819 = vmatprep.subr.mxu0 0.0
    %1820 = vmatpush1.msra.mxu0 0.0
    %1821 = vmatprep.subr.mxu0 0.0
    %1822 = vmatpush1.msra.mxu0 0.0
    %1823 = vmatprep.subr.mxu0 0.0
    %1824 = vmatpush1.msra.mxu0 0.0
    %1825 = vmatprep.subr.mxu0 0.0
    %1826 = vmatpush1.msra.mxu0 0.0
    %1827 = vmatprep.subr.mxu0 0.0
    %1828 = vmatpush1.msra.mxu0 0.0
    %1829 = vmatprep.subr.mxu0 0.0
    %1830 = vmatpush1.msra.mxu0 0.0
    %1831 = vmatprep.subr.mxu0 0.0
    %1832 = vmatpush1.msra.mxu0 0.0
    %1833 = vmatprep.subr.mxu0 0.0
    %1834 = vmatpush1.msra.mxu0 0.0
    %1835 = vmatprep.subr.mxu0 0.0
    %1836 = vmatpush1.msra.mxu0 0.0
    %1837 = vmatprep.subr.mxu0 0.0
    %1838 = vmatpush1.msra.mxu0 0.0
    %1839 = vmatprep.subr.mxu0 0.0
    %1840 = vmatpush1.msra.mxu0 0.0
    %1841 = vmatprep.subr.mxu0 0.0
    %1842 = vmatpush1.msra.mxu0 0.0
    %1843 = vmatprep.subr.mxu0 0.0
    %1844 = vmatpush1.msra.mxu0 0.0
    %1845 = vmatprep.subr.mxu0 0.0
    %1846 = vmatpush1.msra.mxu0 0.0
    %1847 = vmatprep.mubr.f32.mxu0 0.0
    %1848 = vmatmul.mubr.f32.gmra.mrb[0].mxu0 %v1781
    %v1849 = vpop.f32.mrb[0].mxu0
    %v1850 = vadd.f32 0.0, %v1849
    %v1851 = vpop.f32.mrb[0].mxu0
    %1852 = vdwg.mxu0
    %v1853 = vadd.f32 %v1229, %v1850
    %v1854 = vmul.f32 %v1853, 0.5
    %v1855 = vtanh.pop %v1854
    %v1856 = vmul.f32 %v1855, 0.5
    %v1857 = vadd.f32 %v1856, 0.5
    %v1858 = vtanh.pop %v1853
    %v1859 = vmul.f32 %v1857, %v1771
    %1861 = vrot.lane.b32.xlu0 %v1858, 64
    %v1862 = vpop.permute.xlu0 %1861
    %v1864 = vmul.f32 %v1857, %v1862
    %1866 = vrot.lane.b32.xlu0 %v1864, 32
    %v1867 = vpop.permute.xlu0 %1866
    %v1869 = vadd.f32 %v1859, %v1867
    %v1870 = vtanh.pop %v1869
    %1872 = vrot.lane.b32.xlu0 %v1870, 64
    %v1873 = vpop.permute.xlu0 %1872
    %v1875 = vmul.f32 %v1857, %v1873
    %1877 = vrot.lane.b32.xlu0 %v1875, 32
    %v1878 = vpop.permute.xlu0 %1877
    %v1879 = vsel %vm173, %v1878, 0
    %1881 = vmatprep.subr.mxu0 0.0
    %1882 = vmatpush1.msra.mxu0 %v1007
    %1883 = vmatprep.subr.mxu0 0.0
    %1884 = vmatpush1.msra.mxu0 %v1008
    %1885 = vmatprep.subr.mxu0 0.0
    %1886 = vmatpush1.msra.mxu0 %v1009
    %1887 = vmatprep.subr.mxu0 0.0
    %1888 = vmatpush1.msra.mxu0 %v1010
    %1889 = vmatprep.subr.mxu0 0.0
    %1890 = vmatpush1.msra.mxu0 0.0
    %1891 = vmatprep.subr.mxu0 0.0
    %1892 = vmatpush1.msra.mxu0 0.0
    %1893 = vmatprep.subr.mxu0 0.0
    %1894 = vmatpush1.msra.mxu0 0.0
    %1895 = vmatprep.subr.mxu0 0.0
    %1896 = vmatpush1.msra.mxu0 0.0
    %1897 = vmatprep.subr.mxu0 0.0
    %1898 = vmatpush1.msra.mxu0 0.0
    %1899 = vmatprep.subr.mxu0 0.0
    %1900 = vmatpush1.msra.mxu0 0.0
    %1901 = vmatprep.subr.mxu0 0.0
    %1902 = vmatpush1.msra.mxu0 0.0
    %1903 = vmatprep.subr.mxu0 0.0
    %1904 = vmatpush1.msra.mxu0 0.0
    %1905 = vmatprep.subr.mxu0 0.0
    %1906 = vmatpush1.msra.mxu0 0.0
    %1907 = vmatprep.subr.mxu0 0.0
    %1908 = vmatpush1.msra.mxu0 0.0
    %1909 = vmatprep.subr.mxu0 0.0
    %1910 = vmatpush1.msra.mxu0 0.0
    %1911 = vmatprep.subr.mxu0 0.0
    %1912 = vmatpush1.msra.mxu0 0.0
    %1913 = vmatprep.subr.mxu0 0.0
    %1914 = vmatpush1.msra.mxu0 0.0
    %1915 = vmatprep.subr.mxu0 0.0
    %1916 = vmatpush1.msra.mxu0 0.0
    %1917 = vmatprep.subr.mxu0 0.0
    %1918 = vmatpush1.msra.mxu0 0.0
    %1919 = vmatprep.subr.mxu0 0.0
    %1920 = vmatpush1.msra.mxu0 0.0
    %1921 = vmatprep.subr.mxu0 0.0
    %1922 = vmatpush1.msra.mxu0 0.0
    %1923 = vmatprep.subr.mxu0 0.0
    %1924 = vmatpush1.msra.mxu0 0.0
    %1925 = vmatprep.subr.mxu0 0.0
    %1926 = vmatpush1.msra.mxu0 0.0
    %1927 = vmatprep.subr.mxu0 0.0
    %1928 = vmatpush1.msra.mxu0 0.0
    %1929 = vmatprep.subr.mxu0 0.0
    %1930 = vmatpush1.msra.mxu0 0.0
    %1931 = vmatprep.subr.mxu0 0.0
    %1932 = vmatpush1.msra.mxu0 0.0
    %1933 = vmatprep.subr.mxu0 0.0
    %1934 = vmatpush1.msra.mxu0 0.0
    %1935 = vmatprep.subr.mxu0 0.0
    %1936 = vmatpush1.msra.mxu0 0.0
    %1937 = vmatprep.subr.mxu0 0.0
    %1938 = vmatpush1.msra.mxu0 0.0
    %1939 = vmatprep.subr.mxu0 0.0
    %1940 = vmatpush1.msra.mxu0 0.0
    %1941 = vmatprep.subr.mxu0 0.0
    %1942 = vmatpush1.msra.mxu0 0.0
    %1943 = vmatprep.subr.mxu0 0.0
    %1944 = vmatpush1.msra.mxu0 0.0
    %1945 = vmatprep.mubr.f32.mxu0 0.0
    %1946 = vmatmul.mubr.f32.gmra.mrb[0].mxu0 %v1879
    %v1947 = vpop.f32.mrb[0].mxu0
    %v1948 = vadd.f32 0.0, %v1947
    %v1949 = vpop.f32.mrb[0].mxu0
    %1950 = vdwg.mxu0
    %v1951 = vadd.f32 %v1299, %v1948
    %v1952 = vmul.f32 %v1951, 0.5
    %v1953 = vtanh.pop %v1952
    %v1954 = vmul.f32 %v1953, 0.5
    %v1955 = vadd.f32 %v1954, 0.5
    %v1956 = vtanh.pop %v1951
    %v1957 = vmul.f32 %v1955, %v1869
    %1959 = vrot.lane.b32.xlu0 %v1956, 64
    %v1960 = vpop.permute.xlu0 %1959
    %v1962 = vmul.f32 %v1955, %v1960
    %1964 = vrot.lane.b32.xlu0 %v1962, 32
    %v1965 = vpop.permute.xlu0 %1964
    %v1967 = vadd.f32 %v1957, %v1965
    %v1968 = vtanh.pop %v1967
    %1970 = vrot.lane.b32.xlu0 %v1968, 64
    %v1971 = vpop.permute.xlu0 %1970
    %v1973 = vmul.f32 %v1955, %v1971
    %1975 = vrot.lane.b32.xlu0 %v1973, 32
    %v1976 = vpop.permute.xlu0 %1975
    %v1977 = vsel %vm173, %v1976, 0
    %1979 = vmatprep.subr.mxu0 0.0
    %1980 = vmatpush1.msra.mxu0 %v1007
    %1981 = vmatprep.subr.mxu0 0.0
    %1982 = vmatpush1.msra.mxu0 %v1008
    %1983 = vmatprep.subr.mxu0 0.0
    %1984 = vmatpush1.msra.mxu0 %v1009
    %1985 = vmatprep.subr.mxu0 0.0
    %1986 = vmatpush1.msra.mxu0 %v1010
    %1987 = vmatprep.subr.mxu0 0.0
    %1988 = vmatpush1.msra.mxu0 0.0
    %1989 = vmatprep.subr.mxu0 0.0
    %1990 = vmatpush1.msra.mxu0 0.0
    %1991 = vmatprep.subr.mxu0 0.0
    %1992 = vmatpush1.msra.mxu0 0.0
    %1993 = vmatprep.subr.mxu0 0.0
    %1994 = vmatpush1.msra.mxu0 0.0
    %1995 = vmatprep.subr.mxu0 0.0
    %1996 = vmatpush1.msra.mxu0 0.0
    %1997 = vmatprep.subr.mxu0 0.0
    %1998 = vmatpush1.msra.mxu0 0.0
    %1999 = vmatprep.subr.mxu0 0.0
    %2000 = vmatpush1.msra.mxu0 0.0
    %2001 = vmatprep.subr.mxu0 0.0
    %2002 = vmatpush1.msra.mxu0 0.0
    %2003 = vmatprep.subr.mxu0 0.0
    %2004 = vmatpush1.msra.mxu0 0.0
    %2005 = vmatprep.subr.mxu0 0.0
    %2006 = vmatpush1.msra.mxu0 0.0
    %2007 = vmatprep.subr.mxu0 0.0
    %2008 = vmatpush1.msra.mxu0 0.0
    %2009 = vmatprep.subr.mxu0 0.0
    %2010 = vmatpush1.msra.mxu0 0.0
    %2011 = vmatprep.subr.mxu0 0.0
    %2012 = vmatpush1.msra.mxu0 0.0
    %2013 = vmatprep.subr.mxu0 0.0
    %2014 = vmatpush1.msra.mxu0 0.0
    %2015 = vmatprep.subr.mxu0 0.0
    %2016 = vmatpush1.msra.mxu0 0.0
    %2017 = vmatprep.subr.mxu0 0.0
    %2018 = vmatpush1.msra.mxu0 0.0
    %2019 = vmatprep.subr.mxu0 0.0
    %2020 = vmatpush1.msra.mxu0 0.0
    %2021 = vmatprep.subr.mxu0 0.0
    %2022 = vmatpush1.msra.mxu0 0.0
    %2023 = vmatprep.subr.mxu0 0.0
    %2024 = vmatpush1.msra.mxu0 0.0
    %2025 = vmatprep.subr.mxu0 0.0
    %2026 = vmatpush1.msra.mxu0 0.0
    %2027 = vmatprep.subr.mxu0 0.0
    %2028 = vmatpush1.msra.mxu0 0.0
    %2029 = vmatprep.subr.mxu0 0.0
    %2030 = vmatpush1.msra.mxu0 0.0
    %2031 = vmatprep.subr.mxu0 0.0
    %2032 = vmatpush1.msra.mxu0 0.0
    %2033 = vmatprep.subr.mxu0 0.0
    %2034 = vmatpush1.msra.mxu0 0.0
    %2035 = vmatprep.subr.mxu0 0.0
    %2036 = vmatpush1.msra.mxu0 0.0
    %2037 = vmatprep.subr.mxu0 0.0
    %2038 = vmatpush1.msra.mxu0 0.0
    %2039 = vmatprep.subr.mxu0 0.0
    %2040 = vmatpush1.msra.mxu0 0.0
    %2041 = vmatprep.subr.mxu0 0.0
    %2042 = vmatpush1.msra.mxu0 0.0
    %2043 = vmatprep.mubr.f32.mxu0 0.0
    %2044 = vmatmul.mubr.f32.gmra.mrb[0].mxu0 %v1977
    %v2045 = vpop.f32.mrb[0].mxu0
    %v2046 = vadd.f32 0.0, %v2045
    %v2047 = vpop.f32.mrb[0].mxu0
    %2048 = vdwg.mxu0
    %v2049 = vadd.f32 %v1369, %v2046
    %v2050 = vmul.f32 %v2049, 0.5
    %v2051 = vtanh.pop %v2050
    %v2052 = vmul.f32 %v2051, 0.5
    %v2053 = vadd.f32 %v2052, 0.5
    %v2054 = vtanh.pop %v2049
    %v2055 = vmul.f32 %v2053, %v1967
    %2057 = vrot.lane.b32.xlu0 %v2054, 64
    %v2058 = vpop.permute.xlu0 %2057
    %v2060 = vmul.f32 %v2053, %v2058
    %2062 = vrot.lane.b32.xlu0 %v2060, 32
    %v2063 = vpop.permute.xlu0 %2062
    %v2065 = vadd.f32 %v2055, %v2063
    %v2066 = vtanh.pop %v2065
    %2068 = vrot.lane.b32.xlu0 %v2066, 64
    %v2069 = vpop.permute.xlu0 %2068
    %v2071 = vmul.f32 %v2053, %v2069
    %2073 = vrot.lane.b32.xlu0 %v2071, 32
    %v2074 = vpop.permute.xlu0 %2073
    %v2075 = vsel %vm173, %v2074, 0
    %2077 = vmatprep.subr.mxu0 0.0
    %2078 = vmatpush1.msra.mxu0 %v1007
    %2079 = vmatprep.subr.mxu0 0.0
    %2080 = vmatpush1.msra.mxu0 %v1008
    %2081 = vmatprep.subr.mxu0 0.0
    %2082 = vmatpush1.msra.mxu0 %v1009
    %2083 = vmatprep.subr.mxu0 0.0
    %2084 = vmatpush1.msra.mxu0 %v1010
    %2085 = vmatprep.subr.mxu0 0.0
    %2086 = vmatpush1.msra.mxu0 0.0
    %2087 = vmatprep.subr.mxu0 0.0
    %2088 = vmatpush1.msra.mxu0 0.0
    %2089 = vmatprep.subr.mxu0 0.0
    %2090 = vmatpush1.msra.mxu0 0.0
    %2091 = vmatprep.subr.mxu0 0.0
    %2092 = vmatpush1.msra.mxu0 0.0
    %2093 = vmatprep.subr.mxu0 0.0
    %2094 = vmatpush1.msra.mxu0 0.0
    %2095 = vmatprep.subr.mxu0 0.0
    %2096 = vmatpush1.msra.mxu0 0.0
    %2097 = vmatprep.subr.mxu0 0.0
    %2098 = vmatpush1.msra.mxu0 0.0
    %2099 = vmatprep.subr.mxu0 0.0
    %2100 = vmatpush1.msra.mxu0 0.0
    %2101 = vmatprep.subr.mxu0 0.0
    %2102 = vmatpush1.msra.mxu0 0.0
    %2103 = vmatprep.subr.mxu0 0.0
    %2104 = vmatpush1.msra.mxu0 0.0
    %2105 = vmatprep.subr.mxu0 0.0
    %2106 = vmatpush1.msra.mxu0 0.0
    %2107 = vmatprep.subr.mxu0 0.0
    %2108 = vmatpush1.msra.mxu0 0.0
    %2109 = vmatprep.subr.mxu0 0.0
    %2110 = vmatpush1.msra.mxu0 0.0
    %2111 = vmatprep.subr.mxu0 0.0
    %2112 = vmatpush1.msra.mxu0 0.0
    %2113 = vmatprep.subr.mxu0 0.0
    %2114 = vmatpush1.msra.mxu0 0.0
    %2115 = vmatprep.subr.mxu0 0.0
    %2116 = vmatpush1.msra.mxu0 0.0
    %2117 = vmatprep.subr.mxu0 0.0
    %2118 = vmatpush1.msra.mxu0 0.0
    %2119 = vmatprep.subr.mxu0 0.0
    %2120 = vmatpush1.msra.mxu0 0.0
    %2121 = vmatprep.subr.mxu0 0.0
    %2122 = vmatpush1.msra.mxu0 0.0
    %2123 = vmatprep.subr.mxu0 0.0
    %2124 = vmatpush1.msra.mxu0 0.0
    %2125 = vmatprep.subr.mxu0 0.0
    %2126 = vmatpush1.msra.mxu0 0.0
    %2127 = vmatprep.subr.mxu0 0.0
    %2128 = vmatpush1.msra.mxu0 0.0
    %2129 = vmatprep.subr.mxu0 0.0
    %2130 = vmatpush1.msra.mxu0 0.0
    %2131 = vmatprep.subr.mxu0 0.0
    %2132 = vmatpush1.msra.mxu0 0.0
    %2133 = vmatprep.subr.mxu0 0.0
    %2134 = vmatpush1.msra.mxu0 0.0
    %2135 = vmatprep.subr.mxu0 0.0
    %2136 = vmatpush1.msra.mxu0 0.0
    %2137 = vmatprep.subr.mxu0 0.0
    %2138 = vmatpush1.msra.mxu0 0.0
    %2139 = vmatprep.subr.mxu0 0.0
    %2140 = vmatpush1.msra.mxu0 0.0
    %2141 = vmatprep.mubr.f32.mxu0 0.0
    %2142 = vmatmul.mubr.f32.gmra.mrb[0].mxu0 %v2075
    %v2143 = vpop.f32.mrb[0].mxu0
    %v2144 = vadd.f32 0.0, %v2143
    %v2145 = vpop.f32.mrb[0].mxu0
    %2146 = vdwg.mxu0
    %v2147 = vadd.f32 %v1439, %v2144
    %v2148 = vmul.f32 %v2147, 0.5
    %v2149 = vtanh.pop %v2148
    %v2150 = vmul.f32 %v2149, 0.5
    %v2151 = vadd.f32 %v2150, 0.5
    %v2152 = vtanh.pop %v2147
    %v2153 = vmul.f32 %v2151, %v2065
    %2155 = vrot.lane.b32.xlu0 %v2152, 64
    %v2156 = vpop.permute.xlu0 %2155
    %v2158 = vmul.f32 %v2151, %v2156
    %2160 = vrot.lane.b32.xlu0 %v2158, 32
    %v2161 = vpop.permute.xlu0 %2160
    %v2163 = vadd.f32 %v2153, %v2161
    %v2164 = vtanh.pop %v2163
    %2166 = vrot.lane.b32.xlu0 %v2164, 64
    %v2167 = vpop.permute.xlu0 %2166
    %v2169 = vmul.f32 %v2151, %v2167
    %2171 = vrot.lane.b32.xlu0 %v2169, 32
    %v2172 = vpop.permute.xlu0 %2171
    %v2173 = vsel %vm173, %v2172, 0
    %2175 = vmatprep.subr.mxu0 0.0
    %2176 = vmatpush1.msra.mxu0 %v1007
    %2177 = vmatprep.subr.mxu0 0.0
    %2178 = vmatpush1.msra.mxu0 %v1008
    %2179 = vmatprep.subr.mxu0 0.0
    %2180 = vmatpush1.msra.mxu0 %v1009
    %2181 = vmatprep.subr.mxu0 0.0
    %2182 = vmatpush1.msra.mxu0 %v1010
    %2183 = vmatprep.subr.mxu0 0.0
    %2184 = vmatpush1.msra.mxu0 0.0
    %2185 = vmatprep.subr.mxu0 0.0
    %2186 = vmatpush1.msra.mxu0 0.0
    %2187 = vmatprep.subr.mxu0 0.0
    %2188 = vmatpush1.msra.mxu0 0.0
    %2189 = vmatprep.subr.mxu0 0.0
    %2190 = vmatpush1.msra.mxu0 0.0
    %2191 = vmatprep.subr.mxu0 0.0
    %2192 = vmatpush1.msra.mxu0 0.0
    %2193 = vmatprep.subr.mxu0 0.0
    %2194 = vmatpush1.msra.mxu0 0.0
    %2195 = vmatprep.subr.mxu0 0.0
    %2196 = vmatpush1.msra.mxu0 0.0
    %2197 = vmatprep.subr.mxu0 0.0
    %2198 = vmatpush1.msra.mxu0 0.0
    %2199 = vmatprep.subr.mxu0 0.0
    %2200 = vmatpush1.msra.mxu0 0.0
    %2201 = vmatprep.subr.mxu0 0.0
    %2202 = vmatpush1.msra.mxu0 0.0
    %2203 = vmatprep.subr.mxu0 0.0
    %2204 = vmatpush1.msra.mxu0 0.0
    %2205 = vmatprep.subr.mxu0 0.0
    %2206 = vmatpush1.msra.mxu0 0.0
    %2207 = vmatprep.subr.mxu0 0.0
    %2208 = vmatpush1.msra.mxu0 0.0
    %2209 = vmatprep.subr.mxu0 0.0
    %2210 = vmatpush1.msra.mxu0 0.0
    %2211 = vmatprep.subr.mxu0 0.0
    %2212 = vmatpush1.msra.mxu0 0.0
    %2213 = vmatprep.subr.mxu0 0.0
    %2214 = vmatpush1.msra.mxu0 0.0
    %2215 = vmatprep.subr.mxu0 0.0
    %2216 = vmatpush1.msra.mxu0 0.0
    %2217 = vmatprep.subr.mxu0 0.0
    %2218 = vmatpush1.msra.mxu0 0.0
    %2219 = vmatprep.subr.mxu0 0.0
    %2220 = vmatpush1.msra.mxu0 0.0
    %2221 = vmatprep.subr.mxu0 0.0
    %2222 = vmatpush1.msra.mxu0 0.0
    %2223 = vmatprep.subr.mxu0 0.0
    %2224 = vmatpush1.msra.mxu0 0.0
    %2225 = vmatprep.subr.mxu0 0.0
    %2226 = vmatpush1.msra.mxu0 0.0
    %2227 = vmatprep.subr.mxu0 0.0
    %2228 = vmatpush1.msra.mxu0 0.0
    %2229 = vmatprep.subr.mxu0 0.0
    %2230 = vmatpush1.msra.mxu0 0.0
    %2231 = vmatprep.subr.mxu0 0.0
    %2232 = vmatpush1.msra.mxu0 0.0
    %2233 = vmatprep.subr.mxu0 0.0
    %2234 = vmatpush1.msra.mxu0 0.0
    %2235 = vmatprep.subr.mxu0 0.0
    %2236 = vmatpush1.msra.mxu0 0.0
    %2237 = vmatprep.subr.mxu0 0.0
    %2238 = vmatpush1.msra.mxu0 0.0
    %2239 = vmatprep.mubr.f32.mxu0 0.0
    %2240 = vmatmul.mubr.f32.gmra.mrb[0].mxu0 %v2173
    %v2241 = vpop.f32.mrb[0].mxu0
    %v2242 = vadd.f32 0.0, %v2241
    %v2243 = vpop.f32.mrb[0].mxu0
    %2244 = vdwg.mxu0
    %v2245 = vadd.f32 %v1509, %v2242
    %v2246 = vmul.f32 %v2245, 0.5
    %v2247 = vtanh.pop %v2246
    %v2248 = vmul.f32 %v2247, 0.5
    %v2249 = vadd.f32 %v2248, 0.5
    %v2250 = vtanh.pop %v2245
    %v2251 = vmul.f32 %v2249, %v2163
    %2253 = vrot.lane.b32.xlu0 %v2250, 64
    %v2254 = vpop.permute.xlu0 %2253
    %v2256 = vmul.f32 %v2249, %v2254
    %2258 = vrot.lane.b32.xlu0 %v2256, 32
    %v2259 = vpop.permute.xlu0 %2258
    %v2261 = vadd.f32 %v2251, %v2259
    %v2262 = vtanh.pop %v2261
    %2264 = vrot.lane.b32.xlu0 %v2262, 64
    %v2265 = vpop.permute.xlu0 %2264
    %v2267 = vmul.f32 %v2249, %v2265
    %2269 = vrot.lane.b32.xlu0 %v2267, 32
    %v2270 = vpop.permute.xlu0 %2269
    %v2271 = vsel %vm173, %v2270, 0
    %2273 = vmatprep.subr.mxu0 0.0
    %2274 = vmatpush1.msra.mxu0 %v1007
    %2275 = vmatprep.subr.mxu0 0.0
    %2276 = vmatpush1.msra.mxu0 %v1008
    %2277 = vmatprep.subr.mxu0 0.0
    %2278 = vmatpush1.msra.mxu0 %v1009
    %2279 = vmatprep.subr.mxu0 0.0
    %2280 = vmatpush1.msra.mxu0 %v1010
    %2281 = vmatprep.subr.mxu0 0.0
    %2282 = vmatpush1.msra.mxu0 0.0
    %2283 = vmatprep.subr.mxu0 0.0
    %2284 = vmatpush1.msra.mxu0 0.0
    %2285 = vmatprep.subr.mxu0 0.0
    %2286 = vmatpush1.msra.mxu0 0.0
    %2287 = vmatprep.subr.mxu0 0.0
    %2288 = vmatpush1.msra.mxu0 0.0
    %2289 = vmatprep.subr.mxu0 0.0
    %2290 = vmatpush1.msra.mxu0 0.0
    %2291 = vmatprep.subr.mxu0 0.0
    %2292 = vmatpush1.msra.mxu0 0.0
    %2293 = vmatprep.subr.mxu0 0.0
    %2294 = vmatpush1.msra.mxu0 0.0
    %2295 = vmatprep.subr.mxu0 0.0
    %2296 = vmatpush1.msra.mxu0 0.0
    %2297 = vmatprep.subr.mxu0 0.0
    %2298 = vmatpush1.msra.mxu0 0.0
    %2299 = vmatprep.subr.mxu0 0.0
    %2300 = vmatpush1.msra.mxu0 0.0
    %2301 = vmatprep.subr.mxu0 0.0
    %2302 = vmatpush1.msra.mxu0 0.0
    %2303 = vmatprep.subr.mxu0 0.0
    %2304 = vmatpush1.msra.mxu0 0.0
    %2305 = vmatprep.subr.mxu0 0.0
    %2306 = vmatpush1.msra.mxu0 0.0
    %2307 = vmatprep.subr.mxu0 0.0
    %2308 = vmatpush1.msra.mxu0 0.0
    %2309 = vmatprep.subr.mxu0 0.0
    %2310 = vmatpush1.msra.mxu0 0.0
    %2311 = vmatprep.subr.mxu0 0.0
    %2312 = vmatpush1.msra.mxu0 0.0
    %2313 = vmatprep.subr.mxu0 0.0
    %2314 = vmatpush1.msra.mxu0 0.0
    %2315 = vmatprep.subr.mxu0 0.0
    %2316 = vmatpush1.msra.mxu0 0.0
    %2317 = vmatprep.subr.mxu0 0.0
    %2318 = vmatpush1.msra.mxu0 0.0
    %2319 = vmatprep.subr.mxu0 0.0
    %2320 = vmatpush1.msra.mxu0 0.0
    %2321 = vmatprep.subr.mxu0 0.0
    %2322 = vmatpush1.msra.mxu0 0.0
    %2323 = vmatprep.subr.mxu0 0.0
    %2324 = vmatpush1.msra.mxu0 0.0
    %2325 = vmatprep.subr.mxu0 0.0
    %2326 = vmatpush1.msra.mxu0 0.0
    %2327 = vmatprep.subr.mxu0 0.0
    %2328 = vmatpush1.msra.mxu0 0.0
    %2329 = vmatprep.subr.mxu0 0.0
    %2330 = vmatpush1.msra.mxu0 0.0
    %2331 = vmatprep.subr.mxu0 0.0
    %2332 = vmatpush1.msra.mxu0 0.0
    %2333 = vmatprep.subr.mxu0 0.0
    %2334 = vmatpush1.msra.mxu0 0.0
    %2335 = vmatprep.subr.mxu0 0.0
    %2336 = vmatpush1.msra.mxu0 0.0
    %2337 = vmatprep.mubr.f32.mxu0 0.0
    %2338 = vmatmul.mubr.f32.gmra.mrb[0].mxu0 %v2271
    %v2339 = vpop.f32.mrb[0].mxu0
    %v2340 = vadd.f32 0.0, %v2339
    %v2341 = vpop.f32.mrb[0].mxu0
    %2342 = vdwg.mxu0
    %v2343 = vadd.f32 %v1584, %v2340
    %v2344 = vmul.f32 %v2343, 0.5
    %v2345 = vtanh.pop %v2344
    %v2346 = vmul.f32 %v2345, 0.5
    %v2347 = vadd.f32 %v2346, 0.5
    %v2348 = vtanh.pop %v2343
    %v2349 = vmul.f32 %v2347, %v2261
    %2351 = vrot.lane.b32.xlu0 %v2348, 64
    %v2352 = vpop.permute.xlu0 %2351
    %v2354 = vmul.f32 %v2347, %v2352
    %2356 = vrot.lane.b32.xlu0 %v2354, 32
    %v2357 = vpop.permute.xlu0 %2356
    %v2359 = vadd.f32 %v2349, %v2357
    %v2360 = vtanh.pop %v2359
    %2362 = vrot.lane.b32.xlu0 %v2360, 64
    %v2363 = vpop.permute.xlu0 %2362
    %v2365 = vmul.f32 %v2347, %v2363
    %2367 = vrot.lane.b32.xlu0 %v2365, 32
    %v2368 = vpop.permute.xlu0 %2367
    %v2370 = vsel %vm173, %v2368, %v2359
    %s2371 = scalar_lea.vmem %s10, 2
    %vm2372 = vcmask 517120
    %2373 = vst.msk [vmem:[%s2371] sm:$0x3] %vm2372, %v2370
    %v2374 = vld [vmem:[%s7] sm:$0xff]
    %v2375 = vld [vmem:[%s7 + $0x8] sm:$0xff]
    %v2376 = vld [vmem:[%s7 + $0x10] sm:$0xff]
    %v2377 = vld [vmem:[%s7 + $0x18] sm:$0xff]
    %v2378 = vld [vmem:[#allocation7] sm:$0x1]
    %v2380 = vlaneseq
    %v2381 = vshrl.u32 %v2380, 7
    %v2382 = vsub.s32 0, %v2381
    %v2383 = vrot.slane %v2378, %v2382
    %v2385 = vsel %vm173, %v2368, 0
    %2387 = vmatprep.subr.mxu0 0.0
    %2388 = vmatpush1.msra.mxu0 %v2374
    %2389 = vmatprep.subr.mxu0 0.0
    %2390 = vmatpush1.msra.mxu0 %v2375
    %2391 = vmatprep.subr.mxu0 0.0
    %2392 = vmatpush1.msra.mxu0 %v2376
    %2393 = vmatprep.subr.mxu0 0.0
    %2394 = vmatpush1.msra.mxu0 %v2377
    %2395 = vmatprep.subr.mxu0 0.0
    %2396 = vmatpush1.msra.mxu0 0.0
    %2397 = vmatprep.subr.mxu0 0.0
    %2398 = vmatpush1.msra.mxu0 0.0
    %2399 = vmatprep.subr.mxu0 0.0
    %2400 = vmatpush1.msra.mxu0 0.0
    %2401 = vmatprep.subr.mxu0 0.0
    %2402 = vmatpush1.msra.mxu0 0.0
    %2403 = vmatprep.subr.mxu0 0.0
    %2404 = vmatpush1.msra.mxu0 0.0
    %2405 = vmatprep.subr.mxu0 0.0
    %2406 = vmatpush1.msra.mxu0 0.0
    %2407 = vmatprep.subr.mxu0 0.0
    %2408 = vmatpush1.msra.mxu0 0.0
    %2409 = vmatprep.subr.mxu0 0.0
    %2410 = vmatpush1.msra.mxu0 0.0
    %2411 = vmatprep.subr.mxu0 0.0
    %2412 = vmatpush1.msra.mxu0 0.0
    %2413 = vmatprep.subr.mxu0 0.0
    %2414 = vmatpush1.msra.mxu0 0.0
    %2415 = vmatprep.subr.mxu0 0.0
    %2416 = vmatpush1.msra.mxu0 0.0
    %2417 = vmatprep.subr.mxu0 0.0
    %2418 = vmatpush1.msra.mxu0 0.0
    %2419 = vmatprep.subr.mxu0 0.0
    %2420 = vmatpush1.msra.mxu0 0.0
    %2421 = vmatprep.subr.mxu0 0.0
    %2422 = vmatpush1.msra.mxu0 0.0
    %2423 = vmatprep.subr.mxu0 0.0
    %2424 = vmatpush1.msra.mxu0 0.0
    %2425 = vmatprep.subr.mxu0 0.0
    %2426 = vmatpush1.msra.mxu0 0.0
    %2427 = vmatprep.subr.mxu0 0.0
    %2428 = vmatpush1.msra.mxu0 0.0
    %2429 = vmatprep.subr.mxu0 0.0
    %2430 = vmatpush1.msra.mxu0 0.0
    %2431 = vmatprep.subr.mxu0 0.0
    %2432 = vmatpush1.msra.mxu0 0.0
    %2433 = vmatprep.subr.mxu0 0.0
    %2434 = vmatpush1.msra.mxu0 0.0
    %2435 = vmatprep.subr.mxu0 0.0
    %2436 = vmatpush1.msra.mxu0 0.0
    %2437 = vmatprep.subr.mxu0 0.0
    %2438 = vmatpush1.msra.mxu0 0.0
    %2439 = vmatprep.subr.mxu0 0.0
    %2440 = vmatpush1.msra.mxu0 0.0
    %2441 = vmatprep.subr.mxu0 0.0
    %2442 = vmatpush1.msra.mxu0 0.0
    %2443 = vmatprep.subr.mxu0 0.0
    %2444 = vmatpush1.msra.mxu0 0.0
    %2445 = vmatprep.subr.mxu0 0.0
    %2446 = vmatpush1.msra.mxu0 0.0
    %2447 = vmatprep.subr.mxu0 0.0
    %2448 = vmatpush1.msra.mxu0 0.0
    %2449 = vmatprep.subr.mxu0 0.0
    %2450 = vmatpush1.msra.mxu0 0.0
    %2451 = vmatprep.mubr.f32.mxu0 0.0
    %2452 = vmatmul.mubr.f32.gmra.mrb[0].mxu0 %v2385
    %v2453 = vpop.f32.mrb[0].mxu0
    %v2454 = vadd.f32 %v2383, %v2453
    %v2455 = vpop.f32.mrb[0].mxu0
    %2456 = vdwg.mxu0
    %v2457 = vmul.f32 %v2454, 0.5
    %v2458 = vtanh.pop %v2457
    %v2459 = vmul.f32 %v2458, 0.5
    %v2460 = vadd.f32 %v2459, 0.5
    %vm2461 = vcmask 9216
    %2462 = vst.msk [vmem:[#allocation8] sm:$0x3] %vm2461, %v2460
    // Predicated region
    $region50: #{simple_forward.1} parent=1 // pred_check
      _
    $region51: #{simple_forward.1} parent=1 // pred_check_branch
      %2464 = sbr.rel (0) target = $region53
    $region52: #{simple_forward.1} parent=1 // pred_region
      %s2466 = ssub.s32 32, 32
      %2467 = vsyncadd [#allocation4], %s2466
      %s2469 = sshll.u32 [#allocation8], 4
      %s2470 = int_to_ptr.vmem [resolvable:$true] %s2469
      %2472 = dma.vmem_to_hbm [thread:$0]  %s2470, 32, %s9, [#allocation4]
    $region53: #{simple_forward.1} parent=1 // pred_fallthru
      _
    // Predicated region
    $region54: #{simple_forward.1} parent=1 // pred_check
      _
    $region55: #{simple_forward.1} parent=1 // pred_check_branch
      %2474 = sbr.rel (0) target = $region57
    $region56: #{simple_forward.1} parent=1 // pred_region
      _
    $region57: #{simple_forward.1} parent=1 // pred_fallthru
      _
    // Predicated region
    $region58: #{simple_forward.1} parent=1 // pred_check
      _
    $region59: #{simple_forward.1} parent=1 // pred_check_branch
      %2476 = sbr.rel (0) target = $region61
    $region60: #{simple_forward.1} parent=1 // pred_region
      %2477 = dma.done [#allocation4], 32
    $region61: #{simple_forward.1} parent=1 // pred_fallthru
      _
    // Predicated region
    $region62: #{simple_forward.1} parent=1 // pred_check
      _
    $region63: #{simple_forward.1} parent=1 // pred_check_branch
      %2479 = sbr.rel (0) target = $region65
    $region64: #{simple_forward.1} parent=1 // pred_region
      _
    $region65: #{simple_forward.1} parent=1 // pred_fallthru
      _
    %2480 = vsyncpa [#allocation3], 1
    %2481 = vsyncpa [#allocation6], 1
    %2482 = vsyncpa [#allocation4], 1

</llo_original>
